<compile_context>
chip_gen: v7x
topology: tpu7x:2x2x1
jax: 0.10.0
libtpu: 0.0.40
codegen_flags: <defaults>
</compile_context>

<pallas_src>
import functools

import jax
import jax.numpy as jnp
from jax.experimental import pallas as pl
from jax.experimental.pallas import tpu as pltpu

_LANE = 128
_VMEM_LIMIT_BYTES = 32 * 1024 * 1024   # explicit scoped-VMEM limit (v7x-safe)
_VMEM_TILE_BUDGET = 24 * 1024 * 1024   # budget used to size tile_n


def _round_up(x, m):
    return ((x + m - 1) // m) * m


def _pad2d(a, rows, cols):
    r, c = a.shape
    return jnp.pad(a, ((0, rows - r), (0, cols - c)))


def _erf(x):
    """Abramowitz & Stegun 7.1.26 erf (|err| <= 1.5e-7).

    Built from mul/add/exp only: the polynomial runs on the VPU, the exp on
    the EUP, and we avoid depending on a lax.erf lowering in Mosaic.
    """
    a1, a2, a3, a4, a5 = (0.254829592, -0.284496736, 1.421413741,
                          -1.453152027, 1.061405429)
    p = 0.3275911
    sgn = jnp.where(x < 0.0, -1.0, 1.0)
    ax = jnp.abs(x)
    t = 1.0 / (1.0 + p * ax)
    poly = ((((a5 * t + a4) * t + a3) * t + a2) * t + a1) * t
    return sgn * (1.0 - poly * jnp.exp(-ax * ax))


def _gelu(x, approx):
    if approx:
        # tanh approximation routes the transcendental through the EUP slot
        # (nearly free on v5e where the VALU is the scarce resource).
        return jax.nn.gelu(x, approximate=True)
    return 0.5 * x * (1.0 + _erf(x * 0.7071067811865476))   # exact nn.GELU()


def _catattn_kernel(use_activation, gelu_approx, t_true, n_x, *refs):
    x_refs = refs[:n_x]
    w_refs = refs[n_x:2 * n_x]
    (bvo_ref, g_ref, beta_ref, w1_ref, b1_ref, w2_ref, b2_ref,
     o_ref) = refs[2 * n_x:]

    # ---- attention with seq_len == 1: folded V-proj + out-proj -------------
    acc = jnp.dot(x_refs[0][...], w_refs[0][...],
                  preferred_element_type=jnp.float32)
    for i in range(1, n_x):
        acc = acc + jnp.dot(x_refs[i][...], w_refs[i][...],
                            preferred_element_type=jnp.float32)
    attn = acc + bvo_ref[...]                                # [tile_n, T_pad]

    # ---- LayerNorm over the true T lanes (two-pass; padded lanes masked) ---
    inv_t = 1.0 / t_true
    mu = jnp.sum(attn, axis=-1, keepdims=True) * inv_t       # pads are zero
    lane = jax.lax.broadcasted_iota(jnp.int32, attn.shape, 1)
    centered = jnp.where(lane < t_true, attn - mu, 0.0)
    var = jnp.sum(centered * centered, axis=-1, keepdims=True) * inv_t
    ln = centered * jax.lax.rsqrt(var + 1e-5) * g_ref[...] + beta_ref[...]

    # ---- proj: Linear -> GELU -> Linear -------------------------------------
    h1 = jnp.dot(ln.astype(w1_ref.dtype), w1_ref[...],
                 preferred_element_type=jnp.float32) + b1_ref[...]
    if use_activation:
        h1 = _gelu(h1, gelu_approx)
    out = jnp.dot(h1.astype(w2_ref.dtype), w2_ref[...],
                  preferred_element_type=jnp.float32) + b2_ref[...]
    o_ref[...] = out.astype(o_ref.dtype)


def prepare_params(params, *, matmul_dtype=jnp.bfloat16):
    """Fold, pad and cast the module weights once (hoisted out of the call path).

    Returns (slabs, dims): lane-padded device arrays plus true/padded sizes.
    """
    T = params["wv"].shape[0]
    H = params["w1"].shape[0]
    O = params["w2"].shape[0]
    T_pad, H_pad, O_pad = (_round_up(d, _LANE) for d in (T, H, O))

    # seq_len == 1  =>  softmax == 1  =>  fold V-proj and out-proj together.
    wvo = params["wv"].T @ params["wo"].T                       # [T, T]
    bvo = params["bv"] @ params["wo"].T + params["bo"]          # [T]

    slabs = dict(
        wvo=_pad2d(wvo, T, T_pad).astype(matmul_dtype),
        bvo=_pad2d(bvo.reshape(1, -1), 1, T_pad).astype(jnp.float32),
        gamma=_pad2d(params["ln_g"].reshape(1, -1), 1, T_pad).astype(jnp.float32),
        beta=_pad2d(params["ln_b"].reshape(1, -1), 1, T_pad).astype(jnp.float32),
        w1=_pad2d(params["w1"].T, T_pad, H_pad).astype(matmul_dtype),
        b1=_pad2d(params["b1"].reshape(1, -1), 1, H_pad).astype(jnp.float32),
        w2=_pad2d(params["w2"].T, H_pad, O_pad).astype(matmul_dtype),
        b2=_pad2d(params["b2"].reshape(1, -1), 1, O_pad).astype(jnp.float32),
    )
    dims = dict(T=T, H=H, O=O, T_pad=T_pad, H_pad=H_pad, O_pad=O_pad)
    return slabs, dims


def cat_multi_attn(h, h_prime, params=None, *, prepared=None,
                   use_activation=True, gelu_approx=False, tile_n=None,
                   matmul_dtype=jnp.bfloat16, out_dtype=jnp.float32,
                   single_buffer_weights=True):
    """Pallas implementation of CatMultiAttn.forward: [N,T1],[N,T2] -> [N,O]."""
    assert h.shape[0] == h_prime.shape[0], "Number of time series (N) must match."
    if prepared is None:
        prepared = prepare_params(params, matmul_dtype=matmul_dtype)
    slabs, dims = prepared
    matmul_dtype = slabs["w1"].dtype

    N, T1 = h.shape
    T2 = h_prime.shape[1]
    T, T_pad = dims["T"], dims["T_pad"]
    H_pad, O_pad = dims["H_pad"], dims["O_pad"]
    assert T1 + T2 == T, "prepared params were built for a different input_time"

    # Attention-path inputs: lane-sparse halves are concatenated in the
    # wrapper (one K=T matmul, one input DMA per tile); keep the split-weight
    # form only when both halves are already lane-aligned.
    if T1 % _LANE == 0 and T2 % _LANE == 0:
        xs = [h.astype(matmul_dtype), h_prime.astype(matmul_dtype)]
        ws = [slabs["wvo"][:T1], slabs["wvo"][T1:]]
    else:
        xs = [jnp.concatenate([h, h_prime], axis=1).astype(matmul_dtype)]
        ws = [slabs["wvo"]]

    # ---- tile_n from an explicit VMEM budget (portable down to v7x) ---------
    mm_bytes = jnp.dtype(matmul_dtype).itemsize
    o_bytes = jnp.dtype(out_dtype).itemsize
    sub = 8 if (mm_bytes == 4 and o_bytes == 4) else 16    # sublane granularity
    weight_bytes = sum(int(a.size) * a.dtype.itemsize for a in slabs.values())
    weight_bufs = 1 if single_buffer_weights else 2
    if tile_n is None:
        bytes_per_row = (2 * T * mm_bytes            # double-buffered input tile(s)
                         + 2 * O_pad * o_bytes       # double-buffered output tile
                         + 4 * (T_pad + H_pad + O_pad))   # f32 intermediates
        budget = _VMEM_TILE_BUDGET - weight_bufs * weight_bytes
        # TODO(synk): if resident weights alone blow the VMEM budget, add a K
        # reduction grid axis ("arbitrary", last) with a VMEM accumulator
        # instead of shrinking tile_n; unnecessary for DGDNN-sized weights.
        fit = max(sub, (max(budget, 0) // bytes_per_row) // sub * sub)
        tile_n = min(512, fit)
        # >= 2 grid steps so ("parallel",) can shard rows over both v7x TCs.
        tile_n = max(sub, min(tile_n, _round_up(pl.cdiv(N, 2), sub)))
    tile_n = _round_up(max(tile_n, sub), sub)
    grid = (pl.cdiv(N, tile_n),)

    # Grid-invariant weight specs: single-buffered (no re-DMA, half the VMEM).
    if single_buffer_weights:
        def wspec(shape):
            return pl.BlockSpec(shape, lambda i: (0, 0),
                                pipeline_mode=pl.Buffered(1))
    else:
        def wspec(shape):
            return pl.BlockSpec(shape, lambda i: (0, 0))

    in_specs = (
        [pl.BlockSpec((tile_n, int(x.shape[1])), lambda i: (i, 0)) for x in xs]
        + [wspec(tuple(w.shape)) for w in ws]
        + [wspec(tuple(slabs[k].shape))
           for k in ("bvo", "gamma", "beta", "w1", "b1", "w2", "b2")]
    )

    cost = pl.CostEstimate(
        flops=2 * N * (T * T_pad + T_pad * H_pad + H_pad * O_pad),
        transcendentals=(N * H_pad) if use_activation else 0,
        bytes_accessed=N * T * mm_bytes + N * O_pad * o_bytes + weight_bytes)

    kernel = functools.partial(_catattn_kernel, use_activation, gelu_approx,
                               T, len(xs))

    out = pl.pallas_call(
        kernel,
        out_shape=jax.ShapeDtypeStruct((N, O_pad), out_dtype),
        grid_spec=pltpu.PrefetchScalarGridSpec(
            num_scalar_prefetch=0,
            grid=grid,
            in_specs=in_specs,
            out_specs=pl.BlockSpec((tile_n, O_pad), lambda i: (i, 0)),
        ),
        compiler_params=pltpu.CompilerParams(
            dimension_semantics=("parallel",),
            vmem_limit_bytes=_VMEM_LIMIT_BYTES),
        cost_estimate=cost,
    )(*xs, *ws, slabs["bvo"], slabs["gamma"], slabs["beta"],
      slabs["w1"], slabs["b1"], slabs["w2"], slabs["b2"])

    return out[:, :dims["O"]]


def init_params(key, input_time, hidden_dim, output_dim):
    """Deterministic synthetic parameters matching the nn.Module shapes."""
    ks = jax.random.split(key, 8)
    T, Hd, O = input_time, hidden_dim, output_dim
    scale = lambda fan_in: 1.0 / jnp.sqrt(jnp.float32(fan_in))
    # nn.MultiheadAttention: in_proj_weight [3T, T]; only the V slice matters.
    in_proj_w = jax.random.normal(ks[0], (3 * T, T), jnp.float32) * scale(T)
    in_proj_b = jax.random.normal(ks[1], (3 * T,), jnp.float32) * 0.02
    return {
        "wv": in_proj_w[2 * T:3 * T],                         # [T, T]
        "bv": in_proj_b[2 * T:3 * T],                         # [T]
        "wo": jax.random.normal(ks[2], (T, T), jnp.float32) * scale(T),
        "bo": jax.random.normal(ks[3], (T,), jnp.float32) * 0.02,
        "ln_g": jnp.ones((T,), jnp.float32),
        "ln_b": jnp.zeros((T,), jnp.float32),
        "w1": jax.random.normal(ks[4], (Hd, T), jnp.float32) * scale(T),
        "b1": jax.random.normal(ks[5], (Hd,), jnp.float32) * 0.02,
        "w2": jax.random.normal(ks[6], (O, Hd), jnp.float32) * scale(Hd),
        "b2": jax.random.normal(ks[7], (O,), jnp.float32) * 0.02,
    }


def reference(h, h_prime, params, use_activation=True):
    """Pure-JAX reference of the PyTorch forward (seq_len == 1 attention)."""
    x = jnp.concatenate([h, h_prime], axis=1)
    v = x @ params["wv"].T + params["bv"]
    a = v @ params["wo"].T + params["bo"]
    mu = a.mean(-1, keepdims=True)
    var = ((a - mu) ** 2).mean(-1, keepdims=True)
    ln = (a - mu) / jnp.sqrt(var + 1e-5) * params["ln_g"] + params["ln_b"]
    y = ln @ params["w1"].T + params["b1"]
    if use_activation:
        y = jax.nn.gelu(y, approximate=False)
    return y @ params["w2"].T + params["b2"]


if __name__ == "__main__":
    # Small shapes consistent with the module:
    #   N=16 time series, T1=T2=16 -> input_time=32, num_heads=4 (32 % 4 == 0),
    #   hidden_dim=32, output_dim=16, use_activation=True.
    N, T1, T2 = 16, 16, 16
    input_time = T1 + T2
    hidden_dim, output_dim = 32, 16
    use_activation = True

    key = jax.random.PRNGKey(0)
    k_h, k_hp, k_p = jax.random.split(key, 3)
    h = jax.random.normal(k_h, (N, T1), jnp.float32)
    h_prime = jax.random.normal(k_hp, (N, T2), jnp.float32)
    params = init_params(k_p, input_time, hidden_dim, output_dim)

    ref = reference(h, h_prime, params, use_activation=use_activation)

    # ---- f32 MXU operands: tight check against the PyTorch-style reference --
    prep_f32 = prepare_params(params, matmul_dtype=jnp.float32)
    try:
        out_f32 = jax.block_until_ready(
            cat_multi_attn(h, h_prime, prepared=prep_f32,
                           use_activation=use_activation,
                           single_buffer_weights=True))
        sbw = True
    except Exception:
        # pipeline_mode=pl.Buffered(1) not supported on this JAX build; fall
        # back to default double-buffered weight specs (correctness identical).
        sbw = False
        out_f32 = jax.block_until_ready(
            cat_multi_attn(h, h_prime, prepared=prep_f32,
                           use_activation=use_activation,
                           single_buffer_weights=False))
    assert out_f32.shape == (N, output_dim)
    assert jnp.allclose(out_f32, ref, atol=2e-4, rtol=2e-4), "f32 mismatch vs reference"

    # ---- bf16 MXU operands (default; f32 accumulation): loose check ---------
    prep_bf16 = prepare_params(params, matmul_dtype=jnp.bfloat16)
    out_bf16 = jax.block_until_ready(
        cat_multi_attn(h, h_prime, prepared=prep_bf16,
                       use_activation=use_activation,
                       single_buffer_weights=sbw))
    assert out_bf16.shape == (N, output_dim)
    assert jnp.allclose(out_bf16, ref, atol=1e-1, rtol=0.0), "bf16 mismatch vs reference"

    print("KERNEL_OK")
</pallas_src>

<mosaic_0001>
module attributes {stable_mosaic.version = 11 : i64} {
  func.func @_catattn_kernel(%arg0: i32, %arg1: memref<8x32xf32, #tpu.memory_space<vmem>>, %arg2: memref<32x128xf32, #tpu.memory_space<vmem>>, %arg3: memref<1x128xf32, #tpu.memory_space<vmem>>, %arg4: memref<1x128xf32, #tpu.memory_space<vmem>>, %arg5: memref<1x128xf32, #tpu.memory_space<vmem>>, %arg6: memref<128x128xf32, #tpu.memory_space<vmem>>, %arg7: memref<1x128xf32, #tpu.memory_space<vmem>>, %arg8: memref<128x128xf32, #tpu.memory_space<vmem>>, %arg9: memref<1x128xf32, #tpu.memory_space<vmem>>, %arg10: memref<8x128xf32, #tpu.memory_space<vmem>>) attributes {dimension_semantics = [#tpu.dimension_semantics<parallel>], iteration_bounds = array<i64: 2>, scalar_prefetch = 0 : i64, scratch_operands = 0 : i64, tpu.core_type = #tpu.core_type<tc>, window_params = [{transform_indices = @transform_0, window_bounds = array<i64: 8, 32>}, {pipeline_mode = #tpu.pipeline_mode<synchronous>, transform_indices = @transform_1, window_bounds = array<i64: 32, 128>}, {pipeline_mode = #tpu.pipeline_mode<synchronous>, transform_indices = @transform_2, window_bounds = array<i64: 1, 128>}, {pipeline_mode = #tpu.pipeline_mode<synchronous>, transform_indices = @transform_3, window_bounds = array<i64: 1, 128>}, {pipeline_mode = #tpu.pipeline_mode<synchronous>, transform_indices = @transform_4, window_bounds = array<i64: 1, 128>}, {pipeline_mode = #tpu.pipeline_mode<synchronous>, transform_indices = @transform_5, window_bounds = array<i64: 128, 128>}, {pipeline_mode = #tpu.pipeline_mode<synchronous>, transform_indices = @transform_6, window_bounds = array<i64: 1, 128>}, {pipeline_mode = #tpu.pipeline_mode<synchronous>, transform_indices = @transform_7, window_bounds = array<i64: 128, 128>}, {pipeline_mode = #tpu.pipeline_mode<synchronous>, transform_indices = @transform_8, window_bounds = array<i64: 1, 128>}, {transform_indices = @transform_9, window_bounds = array<i64: 8, 128>}]} {
    %c0 = arith.constant 0 : index
    %c0_0 = arith.constant 0 : index
    %0 = vector.load %arg1[%c0, %c0_0] : memref<8x32xf32, #tpu.memory_space<vmem>>, vector<8x32xf32>
    %c0_1 = arith.constant 0 : index
    %c0_2 = arith.constant 0 : index
    %1 = vector.load %arg2[%c0_1, %c0_2] : memref<32x128xf32, #tpu.memory_space<vmem>>, vector<32x128xf32>
    %cst = arith.constant dense<0.000000e+00> : vector<8x128xf32>
    %2 = tpu.matmul %0, %1, %cst {dimension_numbers = #tpu.dot_dimension_numbers<[1], [0], [0], [1], [0, 0, 1, 1], [], []>} : vector<8x32xf32>, vector<32x128xf32>, vector<8x128xf32> -> vector<8x128xf32>
    %c0_3 = arith.constant 0 : index
    %c0_4 = arith.constant 0 : index
    %3 = vector.load %arg3[%c0_3, %c0_4] : memref<1x128xf32, #tpu.memory_space<vmem>>, vector<1x128xf32>
    %4 = vector.broadcast %3 : vector<1x128xf32> to vector<8x128xf32>
    %5 = arith.addf %2, %4 : vector<8x128xf32>
    %cst_5 = arith.constant dense<0.000000e+00> : vector<8xf32>
    %6 = vector.multi_reduction <add>, %5, %cst_5 [1] : vector<8x128xf32> to vector<8xf32>
    %7 = vector.shape_cast %6 : vector<8xf32> to vector<8x1xf32>
    %cst_6 = arith.constant 3.125000e-02 : f32
    %8 = vector.broadcast %cst_6 : f32 to vector<8x1xf32>
    %9 = arith.mulf %7, %8 : vector<8x1xf32>
    %10 = tpu.iota {dimensions = array<i32: 1>} : vector<8x128xi32>
    %c32_i32 = arith.constant 32 : i32
    %11 = vector.broadcast %c32_i32 : i32 to vector<8x128xi32>
    %12 = arith.cmpi slt, %10, %11 : vector<8x128xi32>
    %13 = vector.broadcast %9 : vector<8x1xf32> to vector<8x128xf32>
    %14 = arith.subf %5, %13 : vector<8x128xf32>
    %cst_7 = arith.constant 0.000000e+00 : f32
    %15 = vector.broadcast %cst_7 : f32 to vector<8x128xf32>
    %16 = arith.select %12, %14, %15 : vector<8x128xi1>, vector<8x128xf32>
    %17 = arith.mulf %16, %16 : vector<8x128xf32>
    %cst_8 = arith.constant dense<0.000000e+00> : vector<8xf32>
    %18 = vector.multi_reduction <add>, %17, %cst_8 [1] : vector<8x128xf32> to vector<8xf32>
    %19 = vector.shape_cast %18 : vector<8xf32> to vector<8x1xf32>
    %cst_9 = arith.constant 3.125000e-02 : f32
    %20 = vector.broadcast %cst_9 : f32 to vector<8x1xf32>
    %21 = arith.mulf %19, %20 : vector<8x1xf32>
    %cst_10 = arith.constant 9.99999974E-6 : f32
    %22 = vector.broadcast %cst_10 : f32 to vector<8x1xf32>
    %23 = arith.addf %21, %22 : vector<8x1xf32>
    %24 = math.rsqrt %23 : vector<8x1xf32>
    %25 = vector.broadcast %24 : vector<8x1xf32> to vector<8x128xf32>
    %26 = arith.mulf %16, %25 : vector<8x128xf32>
    %c0_11 = arith.constant 0 : index
    %c0_12 = arith.constant 0 : index
    %27 = vector.load %arg4[%c0_11, %c0_12] : memref<1x128xf32, #tpu.memory_space<vmem>>, vector<1x128xf32>
    %28 = vector.broadcast %27 : vector<1x128xf32> to vector<8x128xf32>
    %29 = arith.mulf %26, %28 : vector<8x128xf32>
    %c0_13 = arith.constant 0 : index
    %c0_14 = arith.constant 0 : index
    %30 = vector.load %arg5[%c0_13, %c0_14] : memref<1x128xf32, #tpu.memory_space<vmem>>, vector<1x128xf32>
    %31 = vector.broadcast %30 : vector<1x128xf32> to vector<8x128xf32>
    %32 = arith.addf %29, %31 : vector<8x128xf32>
    %c0_15 = arith.constant 0 : index
    %c0_16 = arith.constant 0 : index
    %33 = vector.load %arg6[%c0_15, %c0_16] : memref<128x128xf32, #tpu.memory_space<vmem>>, vector<128x128xf32>
    %cst_17 = arith.constant dense<0.000000e+00> : vector<8x128xf32>
    %34 = tpu.matmul %32, %33, %cst_17 {dimension_numbers = #tpu.dot_dimension_numbers<[1], [0], [0], [1], [0, 0, 1, 1], [], []>} : vector<8x128xf32>, vector<128x128xf32>, vector<8x128xf32> -> vector<8x128xf32>
    %c0_18 = arith.constant 0 : index
    %c0_19 = arith.constant 0 : index
    %35 = vector.load %arg7[%c0_18, %c0_19] : memref<1x128xf32, #tpu.memory_space<vmem>>, vector<1x128xf32>
    %36 = vector.broadcast %35 : vector<1x128xf32> to vector<8x128xf32>
    %37 = arith.addf %34, %36 : vector<8x128xf32>
    %cst_20 = arith.constant 5.000000e-01 : f32
    %38 = vector.broadcast %cst_20 : f32 to vector<8x128xf32>
    %39 = arith.mulf %38, %37 : vector<8x128xf32>
    %cst_21 = arith.constant 0.707106769 : f32
    %40 = vector.broadcast %cst_21 : f32 to vector<8x128xf32>
    %41 = arith.mulf %37, %40 : vector<8x128xf32>
    %cst_22 = arith.constant 0.000000e+00 : f32
    %42 = vector.broadcast %cst_22 : f32 to vector<8x128xf32>
    %43 = arith.cmpf olt, %41, %42 : vector<8x128xf32>
    %cst_23 = arith.constant -1.000000e+00 : f32
    %cst_24 = arith.constant 1.000000e+00 : f32
    %44 = vector.broadcast %cst_23 : f32 to vector<8x128xf32>
    %45 = vector.broadcast %cst_24 : f32 to vector<8x128xf32>
    %46 = arith.select %43, %44, %45 : vector<8x128xi1>, vector<8x128xf32>
    %47 = math.absf %41 : vector<8x128xf32>
    %cst_25 = arith.constant 0.327591091 : f32
    %48 = vector.broadcast %cst_25 : f32 to vector<8x128xf32>
    %49 = arith.mulf %48, %47 : vector<8x128xf32>
    %cst_26 = arith.constant 1.000000e+00 : f32
    %50 = vector.broadcast %cst_26 : f32 to vector<8x128xf32>
    %51 = arith.addf %50, %49 : vector<8x128xf32>
    %cst_27 = arith.constant 1.000000e+00 : f32
    %52 = vector.broadcast %cst_27 : f32 to vector<8x128xf32>
    %53 = arith.divf %52, %51 : vector<8x128xf32>
    %cst_28 = arith.constant 1.06140542 : f32
    %54 = vector.broadcast %cst_28 : f32 to vector<8x128xf32>
    %55 = arith.mulf %54, %53 : vector<8x128xf32>
    %cst_29 = arith.constant -1.45315206 : f32
    %56 = vector.broadcast %cst_29 : f32 to vector<8x128xf32>
    %57 = arith.addf %55, %56 : vector<8x128xf32>
    %58 = arith.mulf %57, %53 : vector<8x128xf32>
    %cst_30 = arith.constant 1.42141378 : f32
    %59 = vector.broadcast %cst_30 : f32 to vector<8x128xf32>
    %60 = arith.addf %58, %59 : vector<8x128xf32>
    %61 = arith.mulf %60, %53 : vector<8x128xf32>
    %cst_31 = arith.constant -0.284496725 : f32
    %62 = vector.broadcast %cst_31 : f32 to vector<8x128xf32>
    %63 = arith.addf %61, %62 : vector<8x128xf32>
    %64 = arith.mulf %63, %53 : vector<8x128xf32>
    %cst_32 = arith.constant 0.254829586 : f32
    %65 = vector.broadcast %cst_32 : f32 to vector<8x128xf32>
    %66 = arith.addf %64, %65 : vector<8x128xf32>
    %67 = arith.mulf %66, %53 : vector<8x128xf32>
    %cst_33 = arith.constant 0.000000e+00 : f32
    %68 = vector.broadcast %cst_33 : f32 to vector<8x128xf32>
    %69 = arith.subf %68, %47 : vector<8x128xf32>
    %70 = arith.mulf %69, %47 : vector<8x128xf32>
    %71 = math.exp %70 : vector<8x128xf32>
    %72 = arith.mulf %67, %71 : vector<8x128xf32>
    %cst_34 = arith.constant 1.000000e+00 : f32
    %73 = vector.broadcast %cst_34 : f32 to vector<8x128xf32>
    %74 = arith.subf %73, %72 : vector<8x128xf32>
    %75 = arith.mulf %46, %74 : vector<8x128xf32>
    %cst_35 = arith.constant 1.000000e+00 : f32
    %76 = vector.broadcast %cst_35 : f32 to vector<8x128xf32>
    %77 = arith.addf %76, %75 : vector<8x128xf32>
    %78 = arith.mulf %39, %77 : vector<8x128xf32>
    %c0_36 = arith.constant 0 : index
    %c0_37 = arith.constant 0 : index
    %79 = vector.load %arg8[%c0_36, %c0_37] : memref<128x128xf32, #tpu.memory_space<vmem>>, vector<128x128xf32>
    %cst_38 = arith.constant dense<0.000000e+00> : vector<8x128xf32>
    %80 = tpu.matmul %78, %79, %cst_38 {dimension_numbers = #tpu.dot_dimension_numbers<[1], [0], [0], [1], [0, 0, 1, 1], [], []>} : vector<8x128xf32>, vector<128x128xf32>, vector<8x128xf32> -> vector<8x128xf32>
    %c0_39 = arith.constant 0 : index
    %c0_40 = arith.constant 0 : index
    %81 = vector.load %arg9[%c0_39, %c0_40] : memref<1x128xf32, #tpu.memory_space<vmem>>, vector<1x128xf32>
    %82 = vector.broadcast %81 : vector<1x128xf32> to vector<8x128xf32>
    %83 = arith.addf %80, %82 : vector<8x128xf32>
    %c0_41 = arith.constant 0 : index
    %c0_42 = arith.constant 0 : index
    %84 = vector.load %arg10[%c0_41, %c0_42] : memref<8x128xf32, #tpu.memory_space<vmem>>, vector<8x128xf32>
    tpu.vector_store %arg10[%c0_41, %c0_42], %83 {strides = array<i32>} : memref<8x128xf32, #tpu.memory_space<vmem>>, vector<8x128xf32>,
    return
  }
  func.func @transform_0(%arg0: i32) -> (i32, i32) {
    %c0_i32 = arith.constant 0 : i32
    %c0_i32_0 = arith.constant 0 : i32
    return %arg0, %c0_i32 : i32, i32
  }
  func.func @transform_1(%arg0: i32) -> (i32, i32) {
    %c0_i32 = arith.constant 0 : i32
    %c0_i32_0 = arith.constant 0 : i32
    %c0_i32_1 = arith.constant 0 : i32
    return %c0_i32, %c0_i32_0 : i32, i32
  }
  func.func @transform_2(%arg0: i32) -> (i32, i32) {
    %c0_i32 = arith.constant 0 : i32
    %c0_i32_0 = arith.constant 0 : i32
    %c0_i32_1 = arith.constant 0 : i32
    return %c0_i32, %c0_i32_0 : i32, i32
  }
  func.func @transform_3(%arg0: i32) -> (i32, i32) {
    %c0_i32 = arith.constant 0 : i32
    %c0_i32_0 = arith.constant 0 : i32
    %c0_i32_1 = arith.constant 0 : i32
    return %c0_i32, %c0_i32_0 : i32, i32
  }
  func.func @transform_4(%arg0: i32) -> (i32, i32) {
    %c0_i32 = arith.constant 0 : i32
    %c0_i32_0 = arith.constant 0 : i32
    %c0_i32_1 = arith.constant 0 : i32
    return %c0_i32, %c0_i32_0 : i32, i32
  }
  func.func @transform_5(%arg0: i32) -> (i32, i32) {
    %c0_i32 = arith.constant 0 : i32
    %c0_i32_0 = arith.constant 0 : i32
    %c0_i32_1 = arith.constant 0 : i32
    return %c0_i32, %c0_i32_0 : i32, i32
  }
  func.func @transform_6(%arg0: i32) -> (i32, i32) {
    %c0_i32 = arith.constant 0 : i32
    %c0_i32_0 = arith.constant 0 : i32
    %c0_i32_1 = arith.constant 0 : i32
    return %c0_i32, %c0_i32_0 : i32, i32
  }
  func.func @transform_7(%arg0: i32) -> (i32, i32) {
    %c0_i32 = arith.constant 0 : i32
    %c0_i32_0 = arith.constant 0 : i32
    %c0_i32_1 = arith.constant 0 : i32
    return %c0_i32, %c0_i32_0 : i32, i32
  }
  func.func @transform_8(%arg0: i32) -> (i32, i32) {
    %c0_i32 = arith.constant 0 : i32
    %c0_i32_0 = arith.constant 0 : i32
    %c0_i32_1 = arith.constant 0 : i32
    return %c0_i32, %c0_i32_0 : i32, i32
  }
  func.func @transform_9(%arg0: i32) -> (i32, i32) {
    %c0_i32 = arith.constant 0 : i32
    %c0_i32_0 = arith.constant 0 : i32
    return %arg0, %c0_i32 : i32, i32
  }
}

module attributes {stable_mosaic.version = 11 : i64} {
  func.func @_catattn_kernel(%arg0: i32, %arg1: memref<8x32xf32, #tpu.memory_space<vmem>>, %arg2: memref<32x128xf32, #tpu.memory_space<vmem>>, %arg3: memref<1x128xf32, #tpu.memory_space<vmem>>, %arg4: memref<1x128xf32, #tpu.memory_space<vmem>>, %arg5: memref<1x128xf32, #tpu.memory_space<vmem>>, %arg6: memref<128x128xf32, #tpu.memory_space<vmem>>, %arg7: memref<1x128xf32, #tpu.memory_space<vmem>>, %arg8: memref<128x128xf32, #tpu.memory_space<vmem>>, %arg9: memref<1x128xf32, #tpu.memory_space<vmem>>, %arg10: memref<8x128xf32, #tpu.memory_space<vmem>>) attributes {dimension_semantics = [#tpu.dimension_semantics<parallel>], iteration_bounds = array<i64: 2>, scalar_prefetch = 0 : i64, scratch_operands = 0 : i64, tpu.core_type = #tpu.core_type<tc>, window_params = [{transform_indices = @transform_0, window_bounds = array<i64: 8, 32>}, {pipeline_mode = #tpu.pipeline_mode<synchronous>, transform_indices = @transform_1, window_bounds = array<i64: 32, 128>}, {pipeline_mode = #tpu.pipeline_mode<synchronous>, transform_indices = @transform_2, window_bounds = array<i64: 1, 128>}, {pipeline_mode = #tpu.pipeline_mode<synchronous>, transform_indices = @transform_3, window_bounds = array<i64: 1, 128>}, {pipeline_mode = #tpu.pipeline_mode<synchronous>, transform_indices = @transform_4, window_bounds = array<i64: 1, 128>}, {pipeline_mode = #tpu.pipeline_mode<synchronous>, transform_indices = @transform_5, window_bounds = array<i64: 128, 128>}, {pipeline_mode = #tpu.pipeline_mode<synchronous>, transform_indices = @transform_6, window_bounds = array<i64: 1, 128>}, {pipeline_mode = #tpu.pipeline_mode<synchronous>, transform_indices = @transform_7, window_bounds = array<i64: 128, 128>}, {pipeline_mode = #tpu.pipeline_mode<synchronous>, transform_indices = @transform_8, window_bounds = array<i64: 1, 128>}, {transform_indices = @transform_9, window_bounds = array<i64: 8, 128>}]} {
    %c0 = arith.constant 0 : index
    %c0_0 = arith.constant 0 : index
    %0 = vector.load %arg1[%c0, %c0_0] : memref<8x32xf32, #tpu.memory_space<vmem>>, vector<8x32xf32>
    %c0_1 = arith.constant 0 : index
    %c0_2 = arith.constant 0 : index
    %1 = vector.load %arg2[%c0_1, %c0_2] : memref<32x128xf32, #tpu.memory_space<vmem>>, vector<32x128xf32>
    %cst = arith.constant dense<0.000000e+00> : vector<8x128xf32>
    %2 = tpu.matmul %0, %1, %cst {dimension_numbers = #tpu.dot_dimension_numbers<[1], [0], [0], [1], [0, 0, 1, 1], [], []>} : vector<8x32xf32>, vector<32x128xf32>, vector<8x128xf32> -> vector<8x128xf32>
    %c0_3 = arith.constant 0 : index
    %c0_4 = arith.constant 0 : index
    %3 = vector.load %arg3[%c0_3, %c0_4] : memref<1x128xf32, #tpu.memory_space<vmem>>, vector<1x128xf32>
    %4 = vector.broadcast %3 : vector<1x128xf32> to vector<8x128xf32>
    %5 = arith.addf %2, %4 : vector<8x128xf32>
    %cst_5 = arith.constant dense<0.000000e+00> : vector<8xf32>
    %6 = vector.multi_reduction <add>, %5, %cst_5 [1] : vector<8x128xf32> to vector<8xf32>
    %7 = vector.shape_cast %6 : vector<8xf32> to vector<8x1xf32>
    %cst_6 = arith.constant 3.125000e-02 : f32
    %8 = vector.broadcast %cst_6 : f32 to vector<8x1xf32>
    %9 = arith.mulf %7, %8 : vector<8x1xf32>
    %10 = tpu.iota {dimensions = array<i32: 1>} : vector<8x128xi32>
    %c32_i32 = arith.constant 32 : i32
    %11 = vector.broadcast %c32_i32 : i32 to vector<8x128xi32>
    %12 = arith.cmpi slt, %10, %11 : vector<8x128xi32>
    %13 = vector.broadcast %9 : vector<8x1xf32> to vector<8x128xf32>
    %14 = arith.subf %5, %13 : vector<8x128xf32>
    %cst_7 = arith.constant 0.000000e+00 : f32
    %15 = vector.broadcast %cst_7 : f32 to vector<8x128xf32>
    %16 = arith.select %12, %14, %15 : vector<8x128xi1>, vector<8x128xf32>
    %17 = arith.mulf %16, %16 : vector<8x128xf32>
    %cst_8 = arith.constant dense<0.000000e+00> : vector<8xf32>
    %18 = vector.multi_reduction <add>, %17, %cst_8 [1] : vector<8x128xf32> to vector<8xf32>
    %19 = vector.shape_cast %18 : vector<8xf32> to vector<8x1xf32>
    %cst_9 = arith.constant 3.125000e-02 : f32
    %20 = vector.broadcast %cst_9 : f32 to vector<8x1xf32>
    %21 = arith.mulf %19, %20 : vector<8x1xf32>
    %cst_10 = arith.constant 9.99999974E-6 : f32
    %22 = vector.broadcast %cst_10 : f32 to vector<8x1xf32>
    %23 = arith.addf %21, %22 : vector<8x1xf32>
    %24 = math.rsqrt %23 : vector<8x1xf32>
    %25 = vector.broadcast %24 : vector<8x1xf32> to vector<8x128xf32>
    %26 = arith.mulf %16, %25 : vector<8x128xf32>
    %c0_11 = arith.constant 0 : index
    %c0_12 = arith.constant 0 : index
    %27 = vector.load %arg4[%c0_11, %c0_12] : memref<1x128xf32, #tpu.memory_space<vmem>>, vector<1x128xf32>
    %28 = vector.broadcast %27 : vector<1x128xf32> to vector<8x128xf32>
    %29 = arith.mulf %26, %28 : vector<8x128xf32>
    %c0_13 = arith.constant 0 : index
    %c0_14 = arith.constant 0 : index
    %30 = vector.load %arg5[%c0_13, %c0_14] : memref<1x128xf32, #tpu.memory_space<vmem>>, vector<1x128xf32>
    %31 = vector.broadcast %30 : vector<1x128xf32> to vector<8x128xf32>
    %32 = arith.addf %29, %31 : vector<8x128xf32>
    %c0_15 = arith.constant 0 : index
    %c0_16 = arith.constant 0 : index
    %33 = vector.load %arg6[%c0_15, %c0_16] : memref<128x128xf32, #tpu.memory_space<vmem>>, vector<128x128xf32>
    %cst_17 = arith.constant dense<0.000000e+00> : vector<8x128xf32>
    %34 = tpu.matmul %32, %33, %cst_17 {dimension_numbers = #tpu.dot_dimension_numbers<[1], [0], [0], [1], [0, 0, 1, 1], [], []>} : vector<8x128xf32>, vector<128x128xf32>, vector<8x128xf32> -> vector<8x128xf32>
    %c0_18 = arith.constant 0 : index
    %c0_19 = arith.constant 0 : index
    %35 = vector.load %arg7[%c0_18, %c0_19] : memref<1x128xf32, #tpu.memory_space<vmem>>, vector<1x128xf32>
    %36 = vector.broadcast %35 : vector<1x128xf32> to vector<8x128xf32>
    %37 = arith.addf %34, %36 : vector<8x128xf32>
    %cst_20 = arith.constant 5.000000e-01 : f32
    %38 = vector.broadcast %cst_20 : f32 to vector<8x128xf32>
    %39 = arith.mulf %38, %37 : vector<8x128xf32>
    %cst_21 = arith.constant 0.707106769 : f32
    %40 = vector.broadcast %cst_21 : f32 to vector<8x128xf32>
    %41 = arith.mulf %37, %40 : vector<8x128xf32>
    %cst_22 = arith.constant 0.000000e+00 : f32
    %42 = vector.broadcast %cst_22 : f32 to vector<8x128xf32>
    %43 = arith.cmpf olt, %41, %42 : vector<8x128xf32>
    %cst_23 = arith.constant -1.000000e+00 : f32
    %cst_24 = arith.constant 1.000000e+00 : f32
    %44 = vector.broadcast %cst_23 : f32 to vector<8x128xf32>
    %45 = vector.broadcast %cst_24 : f32 to vector<8x128xf32>
    %46 = arith.select %43, %44, %45 : vector<8x128xi1>, vector<8x128xf32>
    %47 = math.absf %41 : vector<8x128xf32>
    %cst_25 = arith.constant 0.327591091 : f32
    %48 = vector.broadcast %cst_25 : f32 to vector<8x128xf32>
    %49 = arith.mulf %48, %47 : vector<8x128xf32>
    %cst_26 = arith.constant 1.000000e+00 : f32
    %50 = vector.broadcast %cst_26 : f32 to vector<8x128xf32>
    %51 = arith.addf %50, %49 : vector<8x128xf32>
    %cst_27 = arith.constant 1.000000e+00 : f32
    %52 = vector.broadcast %cst_27 : f32 to vector<8x128xf32>
    %53 = arith.divf %52, %51 : vector<8x128xf32>
    %cst_28 = arith.constant 1.06140542 : f32
    %54 = vector.broadcast %cst_28 : f32 to vector<8x128xf32>
    %55 = arith.mulf %54, %53 : vector<8x128xf32>
    %cst_29 = arith.constant -1.45315206 : f32
    %56 = vector.broadcast %cst_29 : f32 to vector<8x128xf32>
    %57 = arith.addf %55, %56 : vector<8x128xf32>
    %58 = arith.mulf %57, %53 : vector<8x128xf32>
    %cst_30 = arith.constant 1.42141378 : f32
    %59 = vector.broadcast %cst_30 : f32 to vector<8x128xf32>
    %60 = arith.addf %58, %59 : vector<8x128xf32>
    %61 = arith.mulf %60, %53 : vector<8x128xf32>
    %cst_31 = arith.constant -0.284496725 : f32
    %62 = vector.broadcast %cst_31 : f32 to vector<8x128xf32>
    %63 = arith.addf %61, %62 : vector<8x128xf32>
    %64 = arith.mulf %63, %53 : vector<8x128xf32>
    %cst_32 = arith.constant 0.254829586 : f32
    %65 = vector.broadcast %cst_32 : f32 to vector<8x128xf32>
    %66 = arith.addf %64, %65 : vector<8x128xf32>
    %67 = arith.mulf %66, %53 : vector<8x128xf32>
    %cst_33 = arith.constant 0.000000e+00 : f32
    %68 = vector.broadcast %cst_33 : f32 to vector<8x128xf32>
    %69 = arith.subf %68, %47 : vector<8x128xf32>
    %70 = arith.mulf %69, %47 : vector<8x128xf32>
    %71 = math.exp %70 : vector<8x128xf32>
    %72 = arith.mulf %67, %71 : vector<8x128xf32>
    %cst_34 = arith.constant 1.000000e+00 : f32
    %73 = vector.broadcast %cst_34 : f32 to vector<8x128xf32>
    %74 = arith.subf %73, %72 : vector<8x128xf32>
    %75 = arith.mulf %46, %74 : vector<8x128xf32>
    %cst_35 = arith.constant 1.000000e+00 : f32
    %76 = vector.broadcast %cst_35 : f32 to vector<8x128xf32>
    %77 = arith.addf %76, %75 : vector<8x128xf32>
    %78 = arith.mulf %39, %77 : vector<8x128xf32>
    %c0_36 = arith.constant 0 : index
    %c0_37 = arith.constant 0 : index
    %79 = vector.load %arg8[%c0_36, %c0_37] : memref<128x128xf32, #tpu.memory_space<vmem>>, vector<128x128xf32>
    %cst_38 = arith.constant dense<0.000000e+00> : vector<8x128xf32>
    %80 = tpu.matmul %78, %79, %cst_38 {dimension_numbers = #tpu.dot_dimension_numbers<[1], [0], [0], [1], [0, 0, 1, 1], [], []>} : vector<8x128xf32>, vector<128x128xf32>, vector<8x128xf32> -> vector<8x128xf32>
    %c0_39 = arith.constant 0 : index
    %c0_40 = arith.constant 0 : index
    %81 = vector.load %arg9[%c0_39, %c0_40] : memref<1x128xf32, #tpu.memory_space<vmem>>, vector<1x128xf32>
    %82 = vector.broadcast %81 : vector<1x128xf32> to vector<8x128xf32>
    %83 = arith.addf %80, %82 : vector<8x128xf32>
    %c0_41 = arith.constant 0 : index
    %c0_42 = arith.constant 0 : index
    %84 = vector.load %arg10[%c0_41, %c0_42] : memref<8x128xf32, #tpu.memory_space<vmem>>, vector<8x128xf32>
    tpu.vector_store %arg10[%c0_41, %c0_42], %83 {strides = array<i32>} : memref<8x128xf32, #tpu.memory_space<vmem>>, vector<8x128xf32>,
    return
  }
  func.func @transform_0(%arg0: i32) -> (i32, i32) {
    %c0_i32 = arith.constant 0 : i32
    %c0_i32_0 = arith.constant 0 : i32
    return %arg0, %c0_i32 : i32, i32
  }
  func.func @transform_1(%arg0: i32) -> (i32, i32) {
    %c0_i32 = arith.constant 0 : i32
    %c0_i32_0 = arith.constant 0 : i32
    %c0_i32_1 = arith.constant 0 : i32
    return %c0_i32, %c0_i32_0 : i32, i32
  }
  func.func @transform_2(%arg0: i32) -> (i32, i32) {
    %c0_i32 = arith.constant 0 : i32
    %c0_i32_0 = arith.constant 0 : i32
    %c0_i32_1 = arith.constant 0 : i32
    return %c0_i32, %c0_i32_0 : i32, i32
  }
  func.func @transform_3(%arg0: i32) -> (i32, i32) {
    %c0_i32 = arith.constant 0 : i32
    %c0_i32_0 = arith.constant 0 : i32
    %c0_i32_1 = arith.constant 0 : i32
    return %c0_i32, %c0_i32_0 : i32, i32
  }
  func.func @transform_4(%arg0: i32) -> (i32, i32) {
    %c0_i32 = arith.constant 0 : i32
    %c0_i32_0 = arith.constant 0 : i32
    %c0_i32_1 = arith.constant 0 : i32
    return %c0_i32, %c0_i32_0 : i32, i32
  }
  func.func @transform_5(%arg0: i32) -> (i32, i32) {
    %c0_i32 = arith.constant 0 : i32
    %c0_i32_0 = arith.constant 0 : i32
    %c0_i32_1 = arith.constant 0 : i32
    return %c0_i32, %c0_i32_0 : i32, i32
  }
  func.func @transform_6(%arg0: i32) -> (i32, i32) {
    %c0_i32 = arith.constant 0 : i32
    %c0_i32_0 = arith.constant 0 : i32
    %c0_i32_1 = arith.constant 0 : i32
    return %c0_i32, %c0_i32_0 : i32, i32
  }
  func.func @transform_7(%arg0: i32) -> (i32, i32) {
    %c0_i32 = arith.constant 0 : i32
    %c0_i32_0 = arith.constant 0 : i32
    %c0_i32_1 = arith.constant 0 : i32
    return %c0_i32, %c0_i32_0 : i32, i32
  }
  func.func @transform_8(%arg0: i32) -> (i32, i32) {
    %c0_i32 = arith.constant 0 : i32
    %c0_i32_0 = arith.constant 0 : i32
    %c0_i32_1 = arith.constant 0 : i32
    return %c0_i32, %c0_i32_0 : i32, i32
  }
  func.func @transform_9(%arg0: i32) -> (i32, i32) {
    %c0_i32 = arith.constant 0 : i32
    %c0_i32_0 = arith.constant 0 : i32
    return %arg0, %c0_i32 : i32, i32
  }
}

</mosaic_0001>

<llo_original>
// kernel: tpu_custom_call.1
$region0: #{tpu_custom_call.1}
  #allocation0 [shape = 'u32[]', space=smem, size = 0x4, offset = 0x4, fixed_abs, tag = 'smem constant byte address 0x4 - core index']
  #allocation1 [shape = 'u32[144,128]{1,0:T(1,128)}', space=vmem, size = 0x12000, scoped, tag = 'internal scratch']
  %s0 = inlined_call_operand.hbm [shape: f32[16,32], index: 0, kind: input, shape index: {}]
  %s1 = inlined_call_operand.hbm [shape: f32[32,128], index: 1, kind: input, shape index: {}]
  %s2 = inlined_call_operand.vmem [shape: f32[1,128], index: 2, kind: input, shape index: {}]
  %s3 = inlined_call_operand.vmem [shape: f32[1,128], index: 3, kind: input, shape index: {}]
  %s4 = inlined_call_operand.vmem [shape: f32[1,128], index: 4, kind: input, shape index: {}]
  %s5 = inlined_call_operand.hbm [shape: f32[128,128], index: 5, kind: input, shape index: {}]
  %s6 = inlined_call_operand.vmem [shape: f32[1,128], index: 6, kind: input, shape index: {}]
  %s7 = inlined_call_operand.hbm [shape: f32[128,128], index: 7, kind: input, shape index: {}]
  %s8 = inlined_call_operand.vmem [shape: f32[1,128], index: 8, kind: input, shape index: {}]
  %s9 = inlined_call_operand.hbm [shape: f32[16,128], index: 9, kind: output, shape index: {}]
  %s10 = sld [smem:[#allocation0]]
  $region85: #{tpu_custom_call.1} parent=0
    _
  %s12 = ssub.s32 1, %s10
  %s13 = scalar_select 0, %s12, %s10
  $region1: #{tpu_custom_call.1} parent=0
    #allocation2 [shape = 'u8[8192]{0}', space=vmem, size = 0x2000, scoped, tag = 'input window, operand 0']
    #allocation3 [shape = 's32[2]{0}', space=sflag, size = 0x8, scoped, tag = 'scoped memory for tpu_custom_call.1']
    #allocation4 [shape = 's32[2]{0}', space=sflag, size = 0x8, scoped, tag = 'scoped memory for tpu_custom_call.1']
    #allocation5 [shape = 'u8[16384]{0}', space=vmem, size = 0x4000, scoped, tag = 'input window, operand 1, single buffered']
    #allocation6 [shape = 's32[1]{0}', space=sflag, size = 0x4, scoped, tag = 'scoped memory for tpu_custom_call.1']
    #allocation7 [shape = 'u8[65536]{0}', space=vmem, size = 0x10000, scoped, tag = 'input window, operand 5, single buffered']
    #allocation8 [shape = 'u8[65536]{0}', space=vmem, size = 0x10000, scoped, tag = 'input window, operand 7, single buffered']
    #allocation9 [shape = 's32[1]{0}', space=sflag, size = 0x4, scoped, tag = 'scoped memory for tpu_custom_call.1']
    #allocation10 [shape = 'u8[8192]{0}', space=vmem, size = 0x2000, scoped, tag = 'output window, operand 0']
    %14 = vsyncpa [#allocation3], 0
    %s15 = scalar_lea.sflag [#allocation3], 1
    %16 = vsyncpa %s15, 0
    %17 = vsyncpa [#allocation6], 0
    %18 = vsyncpa [#allocation9], 0
    %19 = vsyncpa [#allocation4], 0
    %s20 = scalar_lea.sflag [#allocation4], 1
    %21 = vsyncpa %s20, 0
    loop: start=0, step=1, limit=4
    $region2: #{tpu_custom_call.1} parent=1 // loop_pre_header
      _
    $region3: #{tpu_custom_call.1} parent=1 // loop_header
      %s23 = sphi 0, %s27
      %p24 = scmp.ge.s32.totalorder %s23, 4
      %s33 = sphi 0, %s35
      %s36 = sphi 0, %s33
      %s37 = sphi 0, %s36
      %s53 = sphi 0, %s37
      %s57 = sphi 0, %s57
      %s59 = sphi 0, %s57
      %s60 = sphi 0, %s59
      %s74 = sphi 0, %s60
      %s78 = sphi 0, %s78
      %s80 = sphi 0, %s78
      %s81 = sphi 0, %s80
      %s95 = sphi 0, %s81
      %s99 = sphi 0, %s99
      %s101 = sphi 0, %s99
      %s102 = sphi 0, %s101
      %s116 = sphi 0, %s102
      %s120 = sphi 0, %s120
      %s122 = sphi 0, %s120
      %s123 = sphi 0, %s122
      %s137 = sphi 0, %s123
      %s141 = sphi 0, %s141
      %s143 = sphi 0, %s141
      %s144 = sphi 0, %s143
      %s158 = sphi 0, %s144
      %s162 = sphi 0, %s162
      %s164 = sphi 0, %s162
      %s165 = sphi 0, %s164
      %s179 = sphi 0, %s165
      %s183 = sphi 0, %s183
      %s185 = sphi 0, %s183
      %s186 = sphi 0, %s185
      %s200 = sphi 0, %s186
      %s204 = sphi 0, %s204
      %s206 = sphi 0, %s204
      %s207 = sphi 0, %s206
      %s221 = sphi 0, %s207
      %s227 = sphi 0, %s229
      %s230 = sphi 0, %s227
      %s231 = sphi 0, %s230
      %s247 = sphi 0, %s231
    $region4: #{tpu_custom_call.1} parent=1 // loop_header_branch
      %26 = sbr.rel (%p24) target = $region8
    $region5: #{tpu_custom_call.1} parent=1 // loop_body
      %s28 = ssub.s32 %s23, 1
      %s29 = ssub.s32 %s23, 2
      %s30 = sadd.s32 %s23, 1
      %s31 = ssub.s32 %s23, %s30
      %p32 = scmp.eq.s32.totalorder %s31, 0
      %s34 = sadd.s32 %s33, 1
      %s35 = scalar_select %p32, %s33, %s34
      %p38 = pneg %p32
      %p39 = scmp.eq.s32.totalorder %s23, 1
      %p40 = por %p38, %p39
      %p41 = scmp.ne.s32.totalorder %s33, %s36
      %p42 = scmp.eq.s32.totalorder %s23, 0
      %p43 = por %p41, %p42
      %p44 = scmp.ne.s32.totalorder %s33, %s36
      %p45 = scmp.eq.s32.totalorder %s28, 1
      %p46 = por %p44, %p45
      %p47 = scmp.ne.s32.totalorder %s36, %s37
      %p48 = scmp.eq.s32.totalorder %s28, 0
      %p49 = por %p47, %p48
      %p50 = scmp.ne.s32.totalorder %s36, %s37
      %p51 = scmp.eq.s32.totalorder %s29, 1
      %p52 = por %p50, %p51
      %p54 = scmp.ne.s32.totalorder %s37, %s53
      %p55 = scmp.eq.s32.totalorder %s29, 0
      %p56 = por %p54, %p55
      %s58 = sadd.s32 %s57, 1
      %p61 = scmp.eq.s32.totalorder %s23, 1
      %p62 = scmp.ne.s32.totalorder %s57, %s59
      %p63 = scmp.eq.s32.totalorder %s23, 0
      %p64 = por %p62, %p63
      %p65 = scmp.ne.s32.totalorder %s57, %s59
      %p66 = scmp.eq.s32.totalorder %s28, 1
      %p67 = por %p65, %p66
      %p68 = scmp.ne.s32.totalorder %s59, %s60
      %p69 = scmp.eq.s32.totalorder %s28, 0
      %p70 = por %p68, %p69
      %p71 = scmp.ne.s32.totalorder %s59, %s60
      %p72 = scmp.eq.s32.totalorder %s29, 1
      %p73 = por %p71, %p72
      %p75 = scmp.ne.s32.totalorder %s60, %s74
      %p76 = scmp.eq.s32.totalorder %s29, 0
      %p77 = por %p75, %p76
      %s79 = sadd.s32 %s78, 1
      %p82 = scmp.eq.s32.totalorder %s23, 1
      %p83 = scmp.ne.s32.totalorder %s78, %s80
      %p84 = scmp.eq.s32.totalorder %s23, 0
      %p85 = por %p83, %p84
      %p86 = scmp.ne.s32.totalorder %s78, %s80
      %p87 = scmp.eq.s32.totalorder %s28, 1
      %p88 = por %p86, %p87
      %p89 = scmp.ne.s32.totalorder %s80, %s81
      %p90 = scmp.eq.s32.totalorder %s28, 0
      %p91 = por %p89, %p90
      %p92 = scmp.ne.s32.totalorder %s80, %s81
      %p93 = scmp.eq.s32.totalorder %s29, 1
      %p94 = por %p92, %p93
      %p96 = scmp.ne.s32.totalorder %s81, %s95
      %p97 = scmp.eq.s32.totalorder %s29, 0
      %p98 = por %p96, %p97
      %s100 = sadd.s32 %s99, 1
      %p103 = scmp.eq.s32.totalorder %s23, 1
      %p104 = scmp.ne.s32.totalorder %s99, %s101
      %p105 = scmp.eq.s32.totalorder %s23, 0
      %p106 = por %p104, %p105
      %p107 = scmp.ne.s32.totalorder %s99, %s101
      %p108 = scmp.eq.s32.totalorder %s28, 1
      %p109 = por %p107, %p108
      %p110 = scmp.ne.s32.totalorder %s101, %s102
      %p111 = scmp.eq.s32.totalorder %s28, 0
      %p112 = por %p110, %p111
      %p113 = scmp.ne.s32.totalorder %s101, %s102
      %p114 = scmp.eq.s32.totalorder %s29, 1
      %p115 = por %p113, %p114
      %p117 = scmp.ne.s32.totalorder %s102, %s116
      %p118 = scmp.eq.s32.totalorder %s29, 0
      %p119 = por %p117, %p118
      %s121 = sadd.s32 %s120, 1
      %p124 = scmp.eq.s32.totalorder %s23, 1
      %p125 = scmp.ne.s32.totalorder %s120, %s122
      %p126 = scmp.eq.s32.totalorder %s23, 0
      %p127 = por %p125, %p126
      %p128 = scmp.ne.s32.totalorder %s120, %s122
      %p129 = scmp.eq.s32.totalorder %s28, 1
      %p130 = por %p128, %p129
      %p131 = scmp.ne.s32.totalorder %s122, %s123
      %p132 = scmp.eq.s32.totalorder %s28, 0
      %p133 = por %p131, %p132
      %p134 = scmp.ne.s32.totalorder %s122, %s123
      %p135 = scmp.eq.s32.totalorder %s29, 1
      %p136 = por %p134, %p135
      %p138 = scmp.ne.s32.totalorder %s123, %s137
      %p139 = scmp.eq.s32.totalorder %s29, 0
      %p140 = por %p138, %p139
      %s142 = sadd.s32 %s141, 1
      %p145 = scmp.eq.s32.totalorder %s23, 1
      %p146 = scmp.ne.s32.totalorder %s141, %s143
      %p147 = scmp.eq.s32.totalorder %s23, 0
      %p148 = por %p146, %p147
      %p149 = scmp.ne.s32.totalorder %s141, %s143
      %p150 = scmp.eq.s32.totalorder %s28, 1
      %p151 = por %p149, %p150
      %p152 = scmp.ne.s32.totalorder %s143, %s144
      %p153 = scmp.eq.s32.totalorder %s28, 0
      %p154 = por %p152, %p153
      %p155 = scmp.ne.s32.totalorder %s143, %s144
      %p156 = scmp.eq.s32.totalorder %s29, 1
      %p157 = por %p155, %p156
      %p159 = scmp.ne.s32.totalorder %s144, %s158
      %p160 = scmp.eq.s32.totalorder %s29, 0
      %p161 = por %p159, %p160
      %s163 = sadd.s32 %s162, 1
      %p166 = scmp.eq.s32.totalorder %s23, 1
      %p167 = scmp.ne.s32.totalorder %s162, %s164
      %p168 = scmp.eq.s32.totalorder %s23, 0
      %p169 = por %p167, %p168
      %p170 = scmp.ne.s32.totalorder %s162, %s164
      %p171 = scmp.eq.s32.totalorder %s28, 1
      %p172 = por %p170, %p171
      %p173 = scmp.ne.s32.totalorder %s164, %s165
      %p174 = scmp.eq.s32.totalorder %s28, 0
      %p175 = por %p173, %p174
      %p176 = scmp.ne.s32.totalorder %s164, %s165
      %p177 = scmp.eq.s32.totalorder %s29, 1
      %p178 = por %p176, %p177
      %p180 = scmp.ne.s32.totalorder %s165, %s179
      %p181 = scmp.eq.s32.totalorder %s29, 0
      %p182 = por %p180, %p181
      %s184 = sadd.s32 %s183, 1
      %p187 = scmp.eq.s32.totalorder %s23, 1
      %p188 = scmp.ne.s32.totalorder %s183, %s185
      %p189 = scmp.eq.s32.totalorder %s23, 0
      %p190 = por %p188, %p189
      %p191 = scmp.ne.s32.totalorder %s183, %s185
      %p192 = scmp.eq.s32.totalorder %s28, 1
      %p193 = por %p191, %p192
      %p194 = scmp.ne.s32.totalorder %s185, %s186
      %p195 = scmp.eq.s32.totalorder %s28, 0
      %p196 = por %p194, %p195
      %p197 = scmp.ne.s32.totalorder %s185, %s186
      %p198 = scmp.eq.s32.totalorder %s29, 1
      %p199 = por %p197, %p198
      %p201 = scmp.ne.s32.totalorder %s186, %s200
      %p202 = scmp.eq.s32.totalorder %s29, 0
      %p203 = por %p201, %p202
      %s205 = sadd.s32 %s204, 1
      %p208 = scmp.eq.s32.totalorder %s23, 1
      %p209 = scmp.ne.s32.totalorder %s204, %s206
      %p210 = scmp.eq.s32.totalorder %s23, 0
      %p211 = por %p209, %p210
      %p212 = scmp.ne.s32.totalorder %s204, %s206
      %p213 = scmp.eq.s32.totalorder %s28, 1
      %p214 = por %p212, %p213
      %p215 = scmp.ne.s32.totalorder %s206, %s207
      %p216 = scmp.eq.s32.totalorder %s28, 0
      %p217 = por %p215, %p216
      %p218 = scmp.ne.s32.totalorder %s206, %s207
      %p219 = scmp.eq.s32.totalorder %s29, 1
      %p220 = por %p218, %p219
      %p222 = scmp.ne.s32.totalorder %s207, %s221
      %p223 = scmp.eq.s32.totalorder %s29, 0
      %p224 = por %p222, %p223
      %s225 = ssub.s32 %s23, %s30
      %p226 = scmp.eq.s32.totalorder %s225, 0
      %s228 = sadd.s32 %s227, 1
      %s229 = scalar_select %p226, %s227, %s228
      %p232 = pneg %p226
      %p233 = scmp.eq.s32.totalorder %s23, 1
      %p234 = por %p232, %p233
      %p235 = scmp.ne.s32.totalorder %s227, %s230
      %p236 = scmp.eq.s32.totalorder %s23, 0
      %p237 = por %p235, %p236
      %p238 = scmp.ne.s32.totalorder %s227, %s230
      %p239 = scmp.eq.s32.totalorder %s28, 1
      %p240 = por %p238, %p239
      %p241 = scmp.ne.s32.totalorder %s230, %s231
      %p242 = scmp.eq.s32.totalorder %s28, 0
      %p243 = por %p241, %p242
      %p244 = scmp.ne.s32.totalorder %s230, %s231
      %p245 = scmp.eq.s32.totalorder %s29, 1
      %p246 = por %p244, %p245
      %p248 = scmp.ne.s32.totalorder %s231, %s247
      %p249 = scmp.eq.s32.totalorder %s29, 0
      %p250 = por %p248, %p249
      %p251 = scmp.le.s32.totalorder 1, %s23
      %p252 = scmp.lt.s32.totalorder %s23, 3
      %p253 = pnand %p251, %p252
      %p254 = pneg %p253
      // Predicated region
      $region9: #{tpu_custom_call.1} parent=5 // pred_check
        _
      $region10: #{tpu_custom_call.1} parent=5 // pred_check_branch
        %256 = sbr.rel (%p253) target = $region12
      $region11: #{tpu_custom_call.1} parent=5 // pred_region
        %s257 = ssub.s32 %s23, 1
        // Predicated region
        $region13: #{tpu_custom_call.1} parent=11 // pred_check
          %p258 = pneg %p70
        $region14: #{tpu_custom_call.1} parent=11 // pred_check_branch
          %260 = sbr.rel (%p258) target = $region16
        $region15: #{tpu_custom_call.1} parent=11 // pred_region
          %s262 = ssub.s32 512, 512
          %263 = vsyncadd [#allocation6], %s262
          %s264 = sshll.u32 [#allocation5], 4
          %s265 = int_to_ptr.vmem [resolvable:$true] %s264
          %270 = dma.hbm_to_vmem [thread:$0]  %s1, 512, %s265, [#allocation6], 128, 128, 8
        $region16: #{tpu_custom_call.1} parent=11 // pred_fallthru
          _
        // Predicated region
        $region17: #{tpu_custom_call.1} parent=11 // pred_check
          %p271 = pneg %p91
        $region18: #{tpu_custom_call.1} parent=11 // pred_check_branch
          %273 = sbr.rel (%p271) target = $region20
        $region19: #{tpu_custom_call.1} parent=11 // pred_region
          _
        $region20: #{tpu_custom_call.1} parent=11 // pred_fallthru
          _
        // Predicated region
        $region21: #{tpu_custom_call.1} parent=11 // pred_check
          %p274 = pneg %p112
        $region22: #{tpu_custom_call.1} parent=11 // pred_check_branch
          %276 = sbr.rel (%p274) target = $region24
        $region23: #{tpu_custom_call.1} parent=11 // pred_region
          _
        $region24: #{tpu_custom_call.1} parent=11 // pred_fallthru
          _
        // Predicated region
        $region25: #{tpu_custom_call.1} parent=11 // pred_check
          %p277 = pneg %p133
        $region26: #{tpu_custom_call.1} parent=11 // pred_check_branch
          %279 = sbr.rel (%p277) target = $region28
        $region27: #{tpu_custom_call.1} parent=11 // pred_region
          _
        $region28: #{tpu_custom_call.1} parent=11 // pred_fallthru
          _
        // Predicated region
        $region29: #{tpu_custom_call.1} parent=11 // pred_check
          %p280 = pneg %p154
        $region30: #{tpu_custom_call.1} parent=11 // pred_check_branch
          %282 = sbr.rel (%p280) target = $region32
        $region31: #{tpu_custom_call.1} parent=11 // pred_region
          %s284 = ssub.s32 2048, 2048
          %285 = vsyncadd [#allocation6], %s284
          %s286 = sshll.u32 [#allocation7], 4
          %s287 = int_to_ptr.vmem [resolvable:$true] %s286
          %292 = dma.hbm_to_vmem [thread:$0]  %s5, 2048, %s287, [#allocation6], 128, 128, 8
        $region32: #{tpu_custom_call.1} parent=11 // pred_fallthru
          _
        // Predicated region
        $region33: #{tpu_custom_call.1} parent=11 // pred_check
          %p293 = pneg %p175
        $region34: #{tpu_custom_call.1} parent=11 // pred_check_branch
          %295 = sbr.rel (%p293) target = $region36
        $region35: #{tpu_custom_call.1} parent=11 // pred_region
          _
        $region36: #{tpu_custom_call.1} parent=11 // pred_fallthru
          _
        // Predicated region
        $region37: #{tpu_custom_call.1} parent=11 // pred_check
          %p296 = pneg %p196
        $region38: #{tpu_custom_call.1} parent=11 // pred_check_branch
          %298 = sbr.rel (%p296) target = $region40
        $region39: #{tpu_custom_call.1} parent=11 // pred_region
          %s300 = ssub.s32 2048, 2048
          %301 = vsyncadd [#allocation9], %s300
          %s302 = sshll.u32 [#allocation8], 4
          %s303 = int_to_ptr.vmem [resolvable:$true] %s302
          %308 = dma.hbm_to_vmem [thread:$0]  %s7, 2048, %s303, [#allocation9], 128, 128, 8
        $region40: #{tpu_custom_call.1} parent=11 // pred_fallthru
          _
        // Predicated region
        $region41: #{tpu_custom_call.1} parent=11 // pred_check
          %p309 = pneg %p217
        $region42: #{tpu_custom_call.1} parent=11 // pred_check_branch
          %311 = sbr.rel (%p309) target = $region44
        $region43: #{tpu_custom_call.1} parent=11 // pred_region
          _
        $region44: #{tpu_custom_call.1} parent=11 // pred_fallthru
          _
      $region12: #{tpu_custom_call.1} parent=5 // pred_fallthru
        _
      %p312 = scmp.lt.s32.totalorder %s23, 2
      // Predicated region
      $region45: #{tpu_custom_call.1} parent=5 // pred_check
        %p313 = pneg %p312
      $region46: #{tpu_custom_call.1} parent=5 // pred_check_branch
        %315 = sbr.rel (%p313) target = $region48
      $region47: #{tpu_custom_call.1} parent=5 // pred_region
        // Predicated region
        $region49: #{tpu_custom_call.1} parent=47 // pred_check
          %p316 = pneg %p43
        $region50: #{tpu_custom_call.1} parent=47 // pred_check_branch
          %318 = sbr.rel (%p316) target = $region52
        $region51: #{tpu_custom_call.1} parent=47 // pred_region
          %s319 = sand.u32 %s33, 1
          %s320 = scalar_lea.sflag [#allocation3], %s319
          %s321 = sand.u32 %s33, 1
          %s322 = smul.addr %s321, 8
          %s323 = scalar_lea.vmem [#allocation2], %s322
          %s325 = ssub.s32 128, 128
          %326 = vsyncadd %s320, %s325
          %s327 = smul.addr %s23, 128
          %s328 = scalar_lea.hbm %s0, %s327
          %s330 = sshll.u32 %s323, 4
          %s331 = int_to_ptr.vmem [resolvable:$true] %s330
          %333 = dma.hbm_to_vmem [thread:$0]  %s328, 128, %s331, %s320
        $region52: #{tpu_custom_call.1} parent=47 // pred_fallthru
          _
      $region48: #{tpu_custom_call.1} parent=5 // pred_fallthru
        _
      %p334 = scmp.le.s32.totalorder 1, %s23
      %p335 = scmp.lt.s32.totalorder %s23, 3
      %p336 = pnand %p334, %p335
      %p337 = pneg %p336
      // Predicated region
      $region53: #{tpu_custom_call.1} parent=5 // pred_check
        _
      $region54: #{tpu_custom_call.1} parent=5 // pred_check_branch
        %339 = sbr.rel (%p336) target = $region56
      $region55: #{tpu_custom_call.1} parent=5 // pred_region
        %s340 = ssub.s32 %s23, 1
        %s341 = sand.u32 %s36, 1
        %s342 = scalar_lea.sflag [#allocation3], %s341
        %s343 = sand.u32 %s36, 1
        %s344 = smul.addr %s343, 8
        %s345 = scalar_lea.vmem [#allocation2], %s344
        // Predicated region
        $region57: #{tpu_custom_call.1} parent=55 // pred_check
          %p346 = pneg %p49
        $region58: #{tpu_custom_call.1} parent=55 // pred_check_branch
          %348 = sbr.rel (%p346) target = $region60
        $region59: #{tpu_custom_call.1} parent=55 // pred_region
          %349 = dma.done %s342, 128
        $region60: #{tpu_custom_call.1} parent=55 // pred_fallthru
          _
        // Predicated region
        $region61: #{tpu_custom_call.1} parent=55 // pred_check
          %p350 = pneg %p70
        $region62: #{tpu_custom_call.1} parent=55 // pred_check_branch
          %352 = sbr.rel (%p350) target = $region64
        $region63: #{tpu_custom_call.1} parent=55 // pred_region
          %353 = dma.done [#allocation6], 512
        $region64: #{tpu_custom_call.1} parent=55 // pred_fallthru
          _
        // Predicated region
        $region65: #{tpu_custom_call.1} parent=55 // pred_check
          %p354 = pneg %p154
        $region66: #{tpu_custom_call.1} parent=55 // pred_check_branch
          %356 = sbr.rel (%p354) target = $region68
        $region67: #{tpu_custom_call.1} parent=55 // pred_region
          %357 = dma.done [#allocation6], 2048
        $region68: #{tpu_custom_call.1} parent=55 // pred_fallthru
          _
        // Predicated region
        $region69: #{tpu_custom_call.1} parent=55 // pred_check
          %p358 = pneg %p196
        $region70: #{tpu_custom_call.1} parent=55 // pred_check_branch
          %360 = sbr.rel (%p358) target = $region72
        $region71: #{tpu_custom_call.1} parent=55 // pred_region
          %361 = dma.done [#allocation9], 2048
        $region72: #{tpu_custom_call.1} parent=55 // pred_fallthru
          _
        %s362 = sand.u32 %s36, 1
        %s363 = scalar_lea.sflag [#allocation3], %s362
        %s364 = sand.u32 %s36, 1
        %s365 = smul.addr %s364, 8
        %s366 = scalar_lea.vmem [#allocation2], %s365
        %p367 = pneg %p49
        %p368 = pneg %p46
        %p369 = pneg %p70
        %p370 = pneg %p67
        %p371 = pneg %p91
        %p372 = pneg %p88
        %p373 = pneg %p112
        %p374 = pneg %p109
        %p375 = pneg %p133
        %p376 = pneg %p130
        %p377 = pneg %p154
        %p378 = pneg %p151
        %p379 = pneg %p175
        %p380 = pneg %p172
        %p381 = pneg %p196
        %p382 = pneg %p193
        %p383 = pneg %p217
        %p384 = pneg %p214
        %p385 = pneg %p243
        %p386 = pneg %p240
        %s387 = sand.u32 %s230, 1
        %s388 = scalar_lea.sflag [#allocation4], %s387
        %s389 = sand.u32 %s230, 1
        %s390 = smul.addr %s389, 8
        %s391 = scalar_lea.vmem [#allocation10], %s390
        %v392 = vld [vmem:[%s345] sm:$0xff]
        %v393 = vld [vmem:[#allocation5] sm:$0xff]
        %v394 = vld [vmem:[#allocation5 + $0x8] sm:$0xff]
        %v395 = vld [vmem:[#allocation5 + $0x10] sm:$0xff]
        %v396 = vld [vmem:[#allocation5 + $0x18] sm:$0xff]
        %v397 = vld [vmem:[%s2] sm:$0x1]
        %v399 = vlaneseq
        %v400 = vshrl.u32 %v399, 7
        %v401 = vsub.s32 0, %v400
        %v402 = vrot.slane %v397, %v401
        %vm404 = vcmask 261120
        %v406 = vsel %vm404, %v392, 0
        %408 = vmatprep.subr.mxu0 0.0
        %409 = vmatpush1.msra.mxu0 %v393
        %410 = vmatprep.subr.mxu0 0.0
        %411 = vmatpush1.msra.mxu0 %v394
        %412 = vmatprep.subr.mxu0 0.0
        %413 = vmatpush1.msra.mxu0 %v395
        %414 = vmatprep.subr.mxu0 0.0
        %415 = vmatpush1.msra.mxu0 %v396
        %416 = vmatprep.subr.mxu0 0.0
        %417 = vmatpush1.msra.mxu0 0.0
        %418 = vmatprep.subr.mxu0 0.0
        %419 = vmatpush1.msra.mxu0 0.0
        %420 = vmatprep.subr.mxu0 0.0
        %421 = vmatpush1.msra.mxu0 0.0
        %422 = vmatprep.subr.mxu0 0.0
        %423 = vmatpush1.msra.mxu0 0.0
        %424 = vmatprep.subr.mxu0 0.0
        %425 = vmatpush1.msra.mxu0 0.0
        %426 = vmatprep.subr.mxu0 0.0
        %427 = vmatpush1.msra.mxu0 0.0
        %428 = vmatprep.subr.mxu0 0.0
        %429 = vmatpush1.msra.mxu0 0.0
        %430 = vmatprep.subr.mxu0 0.0
        %431 = vmatpush1.msra.mxu0 0.0
        %432 = vmatprep.subr.mxu0 0.0
        %433 = vmatpush1.msra.mxu0 0.0
        %434 = vmatprep.subr.mxu0 0.0
        %435 = vmatpush1.msra.mxu0 0.0
        %436 = vmatprep.subr.mxu0 0.0
        %437 = vmatpush1.msra.mxu0 0.0
        %438 = vmatprep.subr.mxu0 0.0
        %439 = vmatpush1.msra.mxu0 0.0
        %440 = vmatprep.subr.mxu0 0.0
        %441 = vmatpush1.msra.mxu0 0.0
        %442 = vmatprep.subr.mxu0 0.0
        %443 = vmatpush1.msra.mxu0 0.0
        %444 = vmatprep.subr.mxu0 0.0
        %445 = vmatpush1.msra.mxu0 0.0
        %446 = vmatprep.subr.mxu0 0.0
        %447 = vmatpush1.msra.mxu0 0.0
        %448 = vmatprep.subr.mxu0 0.0
        %449 = vmatpush1.msra.mxu0 0.0
        %450 = vmatprep.subr.mxu0 0.0
        %451 = vmatpush1.msra.mxu0 0.0
        %452 = vmatprep.subr.mxu0 0.0
        %453 = vmatpush1.msra.mxu0 0.0
        %454 = vmatprep.subr.mxu0 0.0
        %455 = vmatpush1.msra.mxu0 0.0
        %456 = vmatprep.subr.mxu0 0.0
        %457 = vmatpush1.msra.mxu0 0.0
        %458 = vmatprep.subr.mxu0 0.0
        %459 = vmatpush1.msra.mxu0 0.0
        %460 = vmatprep.subr.mxu0 0.0
        %461 = vmatpush1.msra.mxu0 0.0
        %462 = vmatprep.subr.mxu0 0.0
        %463 = vmatpush1.msra.mxu0 0.0
        %464 = vmatprep.subr.mxu0 0.0
        %465 = vmatpush1.msra.mxu0 0.0
        %466 = vmatprep.subr.mxu0 0.0
        %467 = vmatpush1.msra.mxu0 0.0
        %468 = vmatprep.subr.mxu0 0.0
        %469 = vmatpush1.msra.mxu0 0.0
        %470 = vmatprep.subr.mxu0 0.0
        %471 = vmatpush1.msra.mxu0 0.0
        %472 = vmatprep.mubr.f32.mxu0 0.0
        %473 = vmatmul.mubr.f32.gmra.mrb[0].mxu0 %v406
        %v474 = vpop.f32.mrb[0].mxu0
        %v475 = vadd.f32 %v402, %v474
        %v476 = vpop.f32.mrb[0].mxu0
        %477 = vdwg.mxu0
        %478 = vadd.xlane.f32.xlu0 %v475
        %v479 = vpop.xlane.xlu0 %478
        %v480 = vmul.f32 %v479, 0.03125
        %v481 = vlaneseq
        %v482 = vand.u32 %v481, 127
        %vm483 = vcmp.lt.s32.totalorder %v482, 32
        %v484 = vsub.f32 %v475, %v480
        %v485 = vsel %vm483, %v484, 0.0
        %v486 = vmul.f32 %v485, %v485
        %487 = vadd.xlane.f32.xlu0 %v486
        %v488 = vpop.xlane.xlu0 %487
        %v489 = vmul.f32 %v488, 0.03125
        %v490 = vadd.f32 %v489, 1e-05
        %v491 = vrsqrt.pop %v490
        %v492 = vmul.f32 %v485, %v491
        %v493 = vld [vmem:[%s3] sm:$0x1]
        %v495 = vlaneseq
        %v496 = vshrl.u32 %v495, 7
        %v497 = vsub.s32 0, %v496
        %v498 = vrot.slane %v493, %v497
        %v500 = vmul.f32 %v492, %v498
        %v501 = vld [vmem:[%s4] sm:$0x1]
        %v503 = vlaneseq
        %v504 = vshrl.u32 %v503, 7
        %v505 = vsub.s32 0, %v504
        %v506 = vrot.slane %v501, %v505
        %v508 = vadd.f32 %v500, %v506
        %v509 = vld [vmem:[#allocation7] sm:$0xff]
        %v510 = vld [vmem:[#allocation7 + $0x8] sm:$0xff]
        %v511 = vld [vmem:[#allocation7 + $0x10] sm:$0xff]
        %v512 = vld [vmem:[#allocation7 + $0x18] sm:$0xff]
        %v513 = vld [vmem:[#allocation7 + $0x20] sm:$0xff]
        %v514 = vld [vmem:[#allocation7 + $0x28] sm:$0xff]
        %v515 = vld [vmem:[#allocation7 + $0x30] sm:$0xff]
        %v516 = vld [vmem:[#allocation7 + $0x38] sm:$0xff]
        %v517 = vld [vmem:[#allocation7 + $0x40] sm:$0xff]
        %v518 = vld [vmem:[#allocation7 + $0x48] sm:$0xff]
        %v519 = vld [vmem:[#allocation7 + $0x50] sm:$0xff]
        %v520 = vld [vmem:[#allocation7 + $0x58] sm:$0xff]
        %v521 = vld [vmem:[#allocation7 + $0x60] sm:$0xff]
        %v522 = vld [vmem:[#allocation7 + $0x68] sm:$0xff]
        %v523 = vld [vmem:[#allocation7 + $0x70] sm:$0xff]
        %v524 = vld [vmem:[#allocation7 + $0x78] sm:$0xff]
        %v525 = vld [vmem:[%s6] sm:$0x1]
        %v527 = vlaneseq
        %v528 = vshrl.u32 %v527, 7
        %v529 = vsub.s32 0, %v528
        %v530 = vrot.slane %v525, %v529
        %532 = vmatprep.subr.mxu0 0.0
        %533 = vmatpush1.msra.mxu0 %v509
        %534 = vmatprep.subr.mxu0 0.0
        %535 = vmatpush1.msra.mxu0 %v510
        %536 = vmatprep.subr.mxu0 0.0
        %537 = vmatpush1.msra.mxu0 %v511
        %538 = vmatprep.subr.mxu0 0.0
        %539 = vmatpush1.msra.mxu0 %v512
        %540 = vmatprep.subr.mxu0 0.0
        %541 = vmatpush1.msra.mxu0 %v513
        %542 = vmatprep.subr.mxu0 0.0
        %543 = vmatpush1.msra.mxu0 %v514
        %544 = vmatprep.subr.mxu0 0.0
        %545 = vmatpush1.msra.mxu0 %v515
        %546 = vmatprep.subr.mxu0 0.0
        %547 = vmatpush1.msra.mxu0 %v516
        %548 = vmatprep.subr.mxu0 0.0
        %549 = vmatpush1.msra.mxu0 %v517
        %550 = vmatprep.subr.mxu0 0.0
        %551 = vmatpush1.msra.mxu0 %v518
        %552 = vmatprep.subr.mxu0 0.0
        %553 = vmatpush1.msra.mxu0 %v519
        %554 = vmatprep.subr.mxu0 0.0
        %555 = vmatpush1.msra.mxu0 %v520
        %556 = vmatprep.subr.mxu0 0.0
        %557 = vmatpush1.msra.mxu0 %v521
        %558 = vmatprep.subr.mxu0 0.0
        %559 = vmatpush1.msra.mxu0 %v522
        %560 = vmatprep.subr.mxu0 0.0
        %561 = vmatpush1.msra.mxu0 %v523
        %562 = vmatprep.subr.mxu0 0.0
        %563 = vmatpush1.msra.mxu0 %v524
        %564 = vmatprep.subr.mxu0 0.0
        %565 = vmatpush1.msra.mxu0 0.0
        %566 = vmatprep.subr.mxu0 0.0
        %567 = vmatpush1.msra.mxu0 0.0
        %568 = vmatprep.subr.mxu0 0.0
        %569 = vmatpush1.msra.mxu0 0.0
        %570 = vmatprep.subr.mxu0 0.0
        %571 = vmatpush1.msra.mxu0 0.0
        %572 = vmatprep.subr.mxu0 0.0
        %573 = vmatpush1.msra.mxu0 0.0
        %574 = vmatprep.subr.mxu0 0.0
        %575 = vmatpush1.msra.mxu0 0.0
        %576 = vmatprep.subr.mxu0 0.0
        %577 = vmatpush1.msra.mxu0 0.0
        %578 = vmatprep.subr.mxu0 0.0
        %579 = vmatpush1.msra.mxu0 0.0
        %580 = vmatprep.subr.mxu0 0.0
        %581 = vmatpush1.msra.mxu0 0.0
        %582 = vmatprep.subr.mxu0 0.0
        %583 = vmatpush1.msra.mxu0 0.0
        %584 = vmatprep.subr.mxu0 0.0
        %585 = vmatpush1.msra.mxu0 0.0
        %586 = vmatprep.subr.mxu0 0.0
        %587 = vmatpush1.msra.mxu0 0.0
        %588 = vmatprep.subr.mxu0 0.0
        %589 = vmatpush1.msra.mxu0 0.0
        %590 = vmatprep.subr.mxu0 0.0
        %591 = vmatpush1.msra.mxu0 0.0
        %592 = vmatprep.subr.mxu0 0.0
        %593 = vmatpush1.msra.mxu0 0.0
        %594 = vmatprep.subr.mxu0 0.0
        %595 = vmatpush1.msra.mxu0 0.0
        %596 = vmatprep.mubr.f32.mxu0 0.0
        %597 = vmatmul.mubr.f32.gmra.mrb[0].mxu0 %v508
        %v598 = vpop.f32.mrb[0].mxu0
        %v599 = vadd.f32 %v530, %v598
        %v600 = vpop.f32.mrb[0].mxu0
        %601 = vdwg.mxu0
        %v602 = vmul.f32 %v599, 0.5
        %v603 = vmul.f32 %v599, 0.70710677
        %vm604 = vcmp.lt.f32.partialorder %v603, 0.0
        %v605 = vsel %vm604, -1.0, 1.0
        %v606 = vand.u32 2147483647, %v603
        %v607 = vmul.f32 %v606, 0.3275911
        %v608 = vadd.f32 %v607, 1.0
        %v609 = vrcp.pop %v608
        %v610 = vmul.f32 1.0, %v609
        %v611 = vmul.f32 %v610, 1.0614054
        %v612 = vadd.f32 %v611, -1.4531521
        %v613 = vmul.f32 %v612, %v610
        %v614 = vadd.f32 %v613, 1.4214138
        %v615 = vmul.f32 %v614, %v610
        %v616 = vadd.f32 %v615, -0.28449672
        %v617 = vmul.f32 %v616, %v610
        %v618 = vadd.f32 %v617, 0.2548296
        %v619 = vmul.f32 %v618, %v610
        %v620 = vsub.f32 0.0, %v606
        %v621 = vmul.f32 %v620, %v606
        %v622 = vmul.f32 %v621, 1.442695
        %v623 = vpow.pop %v622
        %v624 = vmul.f32 %v619, %v623
        %v625 = vsub.f32 1.0, %v624
        %v626 = vmul.f32 %v605, %v625
        %v627 = vadd.f32 %v626, 1.0
        %v628 = vmul.f32 %v602, %v627
        %v629 = vld [vmem:[#allocation8] sm:$0xff]
        %v630 = vld [vmem:[#allocation8 + $0x8] sm:$0xff]
        %v631 = vld [vmem:[#allocation8 + $0x10] sm:$0xff]
        %v632 = vld [vmem:[#allocation8 + $0x18] sm:$0xff]
        %v633 = vld [vmem:[#allocation8 + $0x20] sm:$0xff]
        %v634 = vld [vmem:[#allocation8 + $0x28] sm:$0xff]
        %v635 = vld [vmem:[#allocation8 + $0x30] sm:$0xff]
        %v636 = vld [vmem:[#allocation8 + $0x38] sm:$0xff]
        %v637 = vld [vmem:[#allocation8 + $0x40] sm:$0xff]
        %v638 = vld [vmem:[#allocation8 + $0x48] sm:$0xff]
        %v639 = vld [vmem:[#allocation8 + $0x50] sm:$0xff]
        %v640 = vld [vmem:[#allocation8 + $0x58] sm:$0xff]
        %v641 = vld [vmem:[#allocation8 + $0x60] sm:$0xff]
        %v642 = vld [vmem:[#allocation8 + $0x68] sm:$0xff]
        %v643 = vld [vmem:[#allocation8 + $0x70] sm:$0xff]
        %v644 = vld [vmem:[#allocation8 + $0x78] sm:$0xff]
        %v645 = vld [vmem:[%s8] sm:$0x1]
        %v647 = vlaneseq
        %v648 = vshrl.u32 %v647, 7
        %v649 = vsub.s32 0, %v648
        %v650 = vrot.slane %v645, %v649
        %652 = vmatprep.subr.mxu0 0.0
        %653 = vmatpush1.msra.mxu0 %v629
        %654 = vmatprep.subr.mxu0 0.0
        %655 = vmatpush1.msra.mxu0 %v630
        %656 = vmatprep.subr.mxu0 0.0
        %657 = vmatpush1.msra.mxu0 %v631
        %658 = vmatprep.subr.mxu0 0.0
        %659 = vmatpush1.msra.mxu0 %v632
        %660 = vmatprep.subr.mxu0 0.0
        %661 = vmatpush1.msra.mxu0 %v633
        %662 = vmatprep.subr.mxu0 0.0
        %663 = vmatpush1.msra.mxu0 %v634
        %664 = vmatprep.subr.mxu0 0.0
        %665 = vmatpush1.msra.mxu0 %v635
        %666 = vmatprep.subr.mxu0 0.0
        %667 = vmatpush1.msra.mxu0 %v636
        %668 = vmatprep.subr.mxu0 0.0
        %669 = vmatpush1.msra.mxu0 %v637
        %670 = vmatprep.subr.mxu0 0.0
        %671 = vmatpush1.msra.mxu0 %v638
        %672 = vmatprep.subr.mxu0 0.0
        %673 = vmatpush1.msra.mxu0 %v639
        %674 = vmatprep.subr.mxu0 0.0
        %675 = vmatpush1.msra.mxu0 %v640
        %676 = vmatprep.subr.mxu0 0.0
        %677 = vmatpush1.msra.mxu0 %v641
        %678 = vmatprep.subr.mxu0 0.0
        %679 = vmatpush1.msra.mxu0 %v642
        %680 = vmatprep.subr.mxu0 0.0
        %681 = vmatpush1.msra.mxu0 %v643
        %682 = vmatprep.subr.mxu0 0.0
        %683 = vmatpush1.msra.mxu0 %v644
        %684 = vmatprep.subr.mxu0 0.0
        %685 = vmatpush1.msra.mxu0 0.0
        %686 = vmatprep.subr.mxu0 0.0
        %687 = vmatpush1.msra.mxu0 0.0
        %688 = vmatprep.subr.mxu0 0.0
        %689 = vmatpush1.msra.mxu0 0.0
        %690 = vmatprep.subr.mxu0 0.0
        %691 = vmatpush1.msra.mxu0 0.0
        %692 = vmatprep.subr.mxu0 0.0
        %693 = vmatpush1.msra.mxu0 0.0
        %694 = vmatprep.subr.mxu0 0.0
        %695 = vmatpush1.msra.mxu0 0.0
        %696 = vmatprep.subr.mxu0 0.0
        %697 = vmatpush1.msra.mxu0 0.0
        %698 = vmatprep.subr.mxu0 0.0
        %699 = vmatpush1.msra.mxu0 0.0
        %700 = vmatprep.subr.mxu0 0.0
        %701 = vmatpush1.msra.mxu0 0.0
        %702 = vmatprep.subr.mxu0 0.0
        %703 = vmatpush1.msra.mxu0 0.0
        %704 = vmatprep.subr.mxu0 0.0
        %705 = vmatpush1.msra.mxu0 0.0
        %706 = vmatprep.subr.mxu0 0.0
        %707 = vmatpush1.msra.mxu0 0.0
        %708 = vmatprep.subr.mxu0 0.0
        %709 = vmatpush1.msra.mxu0 0.0
        %710 = vmatprep.subr.mxu0 0.0
        %711 = vmatpush1.msra.mxu0 0.0
        %712 = vmatprep.subr.mxu0 0.0
        %713 = vmatpush1.msra.mxu0 0.0
        %714 = vmatprep.subr.mxu0 0.0
        %715 = vmatpush1.msra.mxu0 0.0
        %716 = vmatprep.mubr.f32.mxu0 0.0
        %717 = vmatmul.mubr.f32.gmra.mrb[0].mxu0 %v628
        %v718 = vpop.f32.mrb[0].mxu0
        %v719 = vadd.f32 %v650, %v718
        %v720 = vpop.f32.mrb[0].mxu0
        %721 = vdwg.mxu0
        %722 = vst [vmem:[%s391] sm:$0xff] %v719
        %s723 = sand.u32 %s230, 1
        %s724 = scalar_lea.sflag [#allocation4], %s723
        %s725 = sand.u32 %s230, 1
        %s726 = smul.addr %s725, 8
        %s727 = scalar_lea.vmem [#allocation10], %s726
        // Predicated region
        $region73: #{tpu_custom_call.1} parent=55 // pred_check
          %p728 = pneg %p240
        $region74: #{tpu_custom_call.1} parent=55 // pred_check_branch
          %730 = sbr.rel (%p728) target = $region76
        $region75: #{tpu_custom_call.1} parent=55 // pred_region
          %s732 = ssub.s32 128, 128
          %733 = vsyncadd %s724, %s732
          %s734 = smul.addr %s28, 128
          %s735 = scalar_lea.hbm %s9, %s734
          %s737 = sshll.u32 %s727, 4
          %s738 = int_to_ptr.vmem [resolvable:$true] %s737
          %740 = dma.vmem_to_hbm [thread:$0]  %s738, 128, %s735, %s724
        $region76: #{tpu_custom_call.1} parent=55 // pred_fallthru
          _
      $region56: #{tpu_custom_call.1} parent=5 // pred_fallthru
        _
      %p741 = scmp.le.s32.totalorder 2, %s23
      // Predicated region
      $region77: #{tpu_custom_call.1} parent=5 // pred_check
        %p742 = pneg %p741
      $region78: #{tpu_custom_call.1} parent=5 // pred_check_branch
        %744 = sbr.rel (%p742) target = $region80
      $region79: #{tpu_custom_call.1} parent=5 // pred_region
        %s745 = ssub.s32 %s23, 2
        // Predicated region
        $region81: #{tpu_custom_call.1} parent=79 // pred_check
          %p746 = pneg %p246
        $region82: #{tpu_custom_call.1} parent=79 // pred_check_branch
          %748 = sbr.rel (%p746) target = $region84
        $region83: #{tpu_custom_call.1} parent=79 // pred_region
          %s749 = sand.u32 %s231, 1
          %s750 = scalar_lea.sflag [#allocation4], %s749
          %s751 = sand.u32 %s231, 1
          %s752 = smul.addr %s751, 8
          %s753 = scalar_lea.vmem [#allocation10], %s752
          %754 = dma.done %s750, 128
        $region84: #{tpu_custom_call.1} parent=79 // pred_fallthru
          _
      $region80: #{tpu_custom_call.1} parent=5 // pred_fallthru
        _
    $region6: #{tpu_custom_call.1} parent=1 // loop_footer
      %s27 = sadd.s32 1, %s23
    $region7: #{tpu_custom_call.1} parent=1 // loop_footer_branch
      %22 = sbr.rel target = $region3
    $region8: #{tpu_custom_call.1} parent=1 // loop_exit
      _
    %755 = vsyncpa [#allocation3], 1
    %s756 = scalar_lea.sflag [#allocation3], 1
    %757 = vsyncpa %s756, 1
    %758 = vsyncpa [#allocation6], 1
    %759 = vsyncpa [#allocation9], 1
    %760 = vsyncpa [#allocation4], 1
    %s761 = scalar_lea.sflag [#allocation4], 1
    %762 = vsyncpa %s761, 1

// kernel: tpu_custom_call.1
$region0: #{tpu_custom_call.1}
  #allocation0 [shape = 'u32[]', space=smem, size = 0x4, offset = 0x4, fixed_abs, tag = 'smem constant byte address 0x4 - core index']
  #allocation1 [shape = 'u32[144,128]{1,0:T(1,128)}', space=vmem, size = 0x12000, scoped, tag = 'internal scratch']
  %s0 = inlined_call_operand.hbm [shape: f32[16,32], index: 0, kind: input, shape index: {}]
  %s1 = inlined_call_operand.hbm [shape: f32[32,128], index: 1, kind: input, shape index: {}]
  %s2 = inlined_call_operand.vmem [shape: f32[1,128], index: 2, kind: input, shape index: {}]
  %s3 = inlined_call_operand.vmem [shape: f32[1,128], index: 3, kind: input, shape index: {}]
  %s4 = inlined_call_operand.vmem [shape: f32[1,128], index: 4, kind: input, shape index: {}]
  %s5 = inlined_call_operand.hbm [shape: f32[128,128], index: 5, kind: input, shape index: {}]
  %s6 = inlined_call_operand.vmem [shape: f32[1,128], index: 6, kind: input, shape index: {}]
  %s7 = inlined_call_operand.hbm [shape: f32[128,128], index: 7, kind: input, shape index: {}]
  %s8 = inlined_call_operand.vmem [shape: f32[1,128], index: 8, kind: input, shape index: {}]
  %s9 = inlined_call_operand.hbm [shape: f32[16,128], index: 9, kind: output, shape index: {}]
  %s10 = sld [smem:[#allocation0]]
  $region85: #{tpu_custom_call.1} parent=0
    _
  %s12 = ssub.s32 1, %s10
  %s13 = scalar_select 0, %s12, %s10
  $region1: #{tpu_custom_call.1} parent=0
    #allocation2 [shape = 'u8[8192]{0}', space=vmem, size = 0x2000, scoped, tag = 'input window, operand 0']
    #allocation3 [shape = 's32[2]{0}', space=sflag, size = 0x8, scoped, tag = 'scoped memory for tpu_custom_call.1']
    #allocation4 [shape = 's32[2]{0}', space=sflag, size = 0x8, scoped, tag = 'scoped memory for tpu_custom_call.1']
    #allocation5 [shape = 'u8[16384]{0}', space=vmem, size = 0x4000, scoped, tag = 'input window, operand 1, single buffered']
    #allocation6 [shape = 's32[1]{0}', space=sflag, size = 0x4, scoped, tag = 'scoped memory for tpu_custom_call.1']
    #allocation7 [shape = 'u8[65536]{0}', space=vmem, size = 0x10000, scoped, tag = 'input window, operand 5, single buffered']
    #allocation8 [shape = 'u8[65536]{0}', space=vmem, size = 0x10000, scoped, tag = 'input window, operand 7, single buffered']
    #allocation9 [shape = 's32[1]{0}', space=sflag, size = 0x4, scoped, tag = 'scoped memory for tpu_custom_call.1']
    #allocation10 [shape = 'u8[8192]{0}', space=vmem, size = 0x2000, scoped, tag = 'output window, operand 0']
    %14 = vsyncpa [#allocation3], 0
    %s15 = scalar_lea.sflag [#allocation3], 1
    %16 = vsyncpa %s15, 0
    %17 = vsyncpa [#allocation6], 0
    %18 = vsyncpa [#allocation9], 0
    %19 = vsyncpa [#allocation4], 0
    %s20 = scalar_lea.sflag [#allocation4], 1
    %21 = vsyncpa %s20, 0
    loop: start=0, step=1, limit=4
    $region2: #{tpu_custom_call.1} parent=1 // loop_pre_header
      _
    $region3: #{tpu_custom_call.1} parent=1 // loop_header
      %s23 = sphi 0, %s27
      %p24 = scmp.ge.s32.totalorder %s23, 4
      %s33 = sphi 0, %s35
      %s36 = sphi 0, %s33
      %s37 = sphi 0, %s36
      %s53 = sphi 0, %s37
      %s57 = sphi 0, %s57
      %s59 = sphi 0, %s57
      %s60 = sphi 0, %s59
      %s74 = sphi 0, %s60
      %s78 = sphi 0, %s78
      %s80 = sphi 0, %s78
      %s81 = sphi 0, %s80
      %s95 = sphi 0, %s81
      %s99 = sphi 0, %s99
      %s101 = sphi 0, %s99
      %s102 = sphi 0, %s101
      %s116 = sphi 0, %s102
      %s120 = sphi 0, %s120
      %s122 = sphi 0, %s120
      %s123 = sphi 0, %s122
      %s137 = sphi 0, %s123
      %s141 = sphi 0, %s141
      %s143 = sphi 0, %s141
      %s144 = sphi 0, %s143
      %s158 = sphi 0, %s144
      %s162 = sphi 0, %s162
      %s164 = sphi 0, %s162
      %s165 = sphi 0, %s164
      %s179 = sphi 0, %s165
      %s183 = sphi 0, %s183
      %s185 = sphi 0, %s183
      %s186 = sphi 0, %s185
      %s200 = sphi 0, %s186
      %s204 = sphi 0, %s204
      %s206 = sphi 0, %s204
      %s207 = sphi 0, %s206
      %s221 = sphi 0, %s207
      %s227 = sphi 0, %s229
      %s230 = sphi 0, %s227
      %s231 = sphi 0, %s230
      %s247 = sphi 0, %s231
    $region4: #{tpu_custom_call.1} parent=1 // loop_header_branch
      %26 = sbr.rel (%p24) target = $region8
    $region5: #{tpu_custom_call.1} parent=1 // loop_body
      %s28 = ssub.s32 %s23, 1
      %s29 = ssub.s32 %s23, 2
      %s30 = sadd.s32 %s23, 1
      %s31 = ssub.s32 %s23, %s30
      %p32 = scmp.eq.s32.totalorder %s31, 0
      %s34 = sadd.s32 %s33, 1
      %s35 = scalar_select %p32, %s33, %s34
      %p38 = pneg %p32
      %p39 = scmp.eq.s32.totalorder %s23, 1
      %p40 = por %p38, %p39
      %p41 = scmp.ne.s32.totalorder %s33, %s36
      %p42 = scmp.eq.s32.totalorder %s23, 0
      %p43 = por %p41, %p42
      %p44 = scmp.ne.s32.totalorder %s33, %s36
      %p45 = scmp.eq.s32.totalorder %s28, 1
      %p46 = por %p44, %p45
      %p47 = scmp.ne.s32.totalorder %s36, %s37
      %p48 = scmp.eq.s32.totalorder %s28, 0
      %p49 = por %p47, %p48
      %p50 = scmp.ne.s32.totalorder %s36, %s37
      %p51 = scmp.eq.s32.totalorder %s29, 1
      %p52 = por %p50, %p51
      %p54 = scmp.ne.s32.totalorder %s37, %s53
      %p55 = scmp.eq.s32.totalorder %s29, 0
      %p56 = por %p54, %p55
      %s58 = sadd.s32 %s57, 1
      %p61 = scmp.eq.s32.totalorder %s23, 1
      %p62 = scmp.ne.s32.totalorder %s57, %s59
      %p63 = scmp.eq.s32.totalorder %s23, 0
      %p64 = por %p62, %p63
      %p65 = scmp.ne.s32.totalorder %s57, %s59
      %p66 = scmp.eq.s32.totalorder %s28, 1
      %p67 = por %p65, %p66
      %p68 = scmp.ne.s32.totalorder %s59, %s60
      %p69 = scmp.eq.s32.totalorder %s28, 0
      %p70 = por %p68, %p69
      %p71 = scmp.ne.s32.totalorder %s59, %s60
      %p72 = scmp.eq.s32.totalorder %s29, 1
      %p73 = por %p71, %p72
      %p75 = scmp.ne.s32.totalorder %s60, %s74
      %p76 = scmp.eq.s32.totalorder %s29, 0
      %p77 = por %p75, %p76
      %s79 = sadd.s32 %s78, 1
      %p82 = scmp.eq.s32.totalorder %s23, 1
      %p83 = scmp.ne.s32.totalorder %s78, %s80
      %p84 = scmp.eq.s32.totalorder %s23, 0
      %p85 = por %p83, %p84
      %p86 = scmp.ne.s32.totalorder %s78, %s80
      %p87 = scmp.eq.s32.totalorder %s28, 1
      %p88 = por %p86, %p87
      %p89 = scmp.ne.s32.totalorder %s80, %s81
      %p90 = scmp.eq.s32.totalorder %s28, 0
      %p91 = por %p89, %p90
      %p92 = scmp.ne.s32.totalorder %s80, %s81
      %p93 = scmp.eq.s32.totalorder %s29, 1
      %p94 = por %p92, %p93
      %p96 = scmp.ne.s32.totalorder %s81, %s95
      %p97 = scmp.eq.s32.totalorder %s29, 0
      %p98 = por %p96, %p97
      %s100 = sadd.s32 %s99, 1
      %p103 = scmp.eq.s32.totalorder %s23, 1
      %p104 = scmp.ne.s32.totalorder %s99, %s101
      %p105 = scmp.eq.s32.totalorder %s23, 0
      %p106 = por %p104, %p105
      %p107 = scmp.ne.s32.totalorder %s99, %s101
      %p108 = scmp.eq.s32.totalorder %s28, 1
      %p109 = por %p107, %p108
      %p110 = scmp.ne.s32.totalorder %s101, %s102
      %p111 = scmp.eq.s32.totalorder %s28, 0
      %p112 = por %p110, %p111
      %p113 = scmp.ne.s32.totalorder %s101, %s102
      %p114 = scmp.eq.s32.totalorder %s29, 1
      %p115 = por %p113, %p114
      %p117 = scmp.ne.s32.totalorder %s102, %s116
      %p118 = scmp.eq.s32.totalorder %s29, 0
      %p119 = por %p117, %p118
      %s121 = sadd.s32 %s120, 1
      %p124 = scmp.eq.s32.totalorder %s23, 1
      %p125 = scmp.ne.s32.totalorder %s120, %s122
      %p126 = scmp.eq.s32.totalorder %s23, 0
      %p127 = por %p125, %p126
      %p128 = scmp.ne.s32.totalorder %s120, %s122
      %p129 = scmp.eq.s32.totalorder %s28, 1
      %p130 = por %p128, %p129
      %p131 = scmp.ne.s32.totalorder %s122, %s123
      %p132 = scmp.eq.s32.totalorder %s28, 0
      %p133 = por %p131, %p132
      %p134 = scmp.ne.s32.totalorder %s122, %s123
      %p135 = scmp.eq.s32.totalorder %s29, 1
      %p136 = por %p134, %p135
      %p138 = scmp.ne.s32.totalorder %s123, %s137
      %p139 = scmp.eq.s32.totalorder %s29, 0
      %p140 = por %p138, %p139
      %s142 = sadd.s32 %s141, 1
      %p145 = scmp.eq.s32.totalorder %s23, 1
      %p146 = scmp.ne.s32.totalorder %s141, %s143
      %p147 = scmp.eq.s32.totalorder %s23, 0
      %p148 = por %p146, %p147
      %p149 = scmp.ne.s32.totalorder %s141, %s143
      %p150 = scmp.eq.s32.totalorder %s28, 1
      %p151 = por %p149, %p150
      %p152 = scmp.ne.s32.totalorder %s143, %s144
      %p153 = scmp.eq.s32.totalorder %s28, 0
      %p154 = por %p152, %p153
      %p155 = scmp.ne.s32.totalorder %s143, %s144
      %p156 = scmp.eq.s32.totalorder %s29, 1
      %p157 = por %p155, %p156
      %p159 = scmp.ne.s32.totalorder %s144, %s158
      %p160 = scmp.eq.s32.totalorder %s29, 0
      %p161 = por %p159, %p160
      %s163 = sadd.s32 %s162, 1
      %p166 = scmp.eq.s32.totalorder %s23, 1
      %p167 = scmp.ne.s32.totalorder %s162, %s164
      %p168 = scmp.eq.s32.totalorder %s23, 0
      %p169 = por %p167, %p168
      %p170 = scmp.ne.s32.totalorder %s162, %s164
      %p171 = scmp.eq.s32.totalorder %s28, 1
      %p172 = por %p170, %p171
      %p173 = scmp.ne.s32.totalorder %s164, %s165
      %p174 = scmp.eq.s32.totalorder %s28, 0
      %p175 = por %p173, %p174
      %p176 = scmp.ne.s32.totalorder %s164, %s165
      %p177 = scmp.eq.s32.totalorder %s29, 1
      %p178 = por %p176, %p177
      %p180 = scmp.ne.s32.totalorder %s165, %s179
      %p181 = scmp.eq.s32.totalorder %s29, 0
      %p182 = por %p180, %p181
      %s184 = sadd.s32 %s183, 1
      %p187 = scmp.eq.s32.totalorder %s23, 1
      %p188 = scmp.ne.s32.totalorder %s183, %s185
      %p189 = scmp.eq.s32.totalorder %s23, 0
      %p190 = por %p188, %p189
      %p191 = scmp.ne.s32.totalorder %s183, %s185
      %p192 = scmp.eq.s32.totalorder %s28, 1
      %p193 = por %p191, %p192
      %p194 = scmp.ne.s32.totalorder %s185, %s186
      %p195 = scmp.eq.s32.totalorder %s28, 0
      %p196 = por %p194, %p195
      %p197 = scmp.ne.s32.totalorder %s185, %s186
      %p198 = scmp.eq.s32.totalorder %s29, 1
      %p199 = por %p197, %p198
      %p201 = scmp.ne.s32.totalorder %s186, %s200
      %p202 = scmp.eq.s32.totalorder %s29, 0
      %p203 = por %p201, %p202
      %s205 = sadd.s32 %s204, 1
      %p208 = scmp.eq.s32.totalorder %s23, 1
      %p209 = scmp.ne.s32.totalorder %s204, %s206
      %p210 = scmp.eq.s32.totalorder %s23, 0
      %p211 = por %p209, %p210
      %p212 = scmp.ne.s32.totalorder %s204, %s206
      %p213 = scmp.eq.s32.totalorder %s28, 1
      %p214 = por %p212, %p213
      %p215 = scmp.ne.s32.totalorder %s206, %s207
      %p216 = scmp.eq.s32.totalorder %s28, 0
      %p217 = por %p215, %p216
      %p218 = scmp.ne.s32.totalorder %s206, %s207
      %p219 = scmp.eq.s32.totalorder %s29, 1
      %p220 = por %p218, %p219
      %p222 = scmp.ne.s32.totalorder %s207, %s221
      %p223 = scmp.eq.s32.totalorder %s29, 0
      %p224 = por %p222, %p223
      %s225 = ssub.s32 %s23, %s30
      %p226 = scmp.eq.s32.totalorder %s225, 0
      %s228 = sadd.s32 %s227, 1
      %s229 = scalar_select %p226, %s227, %s228
      %p232 = pneg %p226
      %p233 = scmp.eq.s32.totalorder %s23, 1
      %p234 = por %p232, %p233
      %p235 = scmp.ne.s32.totalorder %s227, %s230
      %p236 = scmp.eq.s32.totalorder %s23, 0
      %p237 = por %p235, %p236
      %p238 = scmp.ne.s32.totalorder %s227, %s230
      %p239 = scmp.eq.s32.totalorder %s28, 1
      %p240 = por %p238, %p239
      %p241 = scmp.ne.s32.totalorder %s230, %s231
      %p242 = scmp.eq.s32.totalorder %s28, 0
      %p243 = por %p241, %p242
      %p244 = scmp.ne.s32.totalorder %s230, %s231
      %p245 = scmp.eq.s32.totalorder %s29, 1
      %p246 = por %p244, %p245
      %p248 = scmp.ne.s32.totalorder %s231, %s247
      %p249 = scmp.eq.s32.totalorder %s29, 0
      %p250 = por %p248, %p249
      %p251 = scmp.le.s32.totalorder 1, %s23
      %p252 = scmp.lt.s32.totalorder %s23, 3
      %p253 = pnand %p251, %p252
      %p254 = pneg %p253
      // Predicated region
      $region9: #{tpu_custom_call.1} parent=5 // pred_check
        _
      $region10: #{tpu_custom_call.1} parent=5 // pred_check_branch
        %256 = sbr.rel (%p253) target = $region12
      $region11: #{tpu_custom_call.1} parent=5 // pred_region
        %s257 = ssub.s32 %s23, 1
        // Predicated region
        $region13: #{tpu_custom_call.1} parent=11 // pred_check
          %p258 = pneg %p70
        $region14: #{tpu_custom_call.1} parent=11 // pred_check_branch
          %260 = sbr.rel (%p258) target = $region16
        $region15: #{tpu_custom_call.1} parent=11 // pred_region
          %s262 = ssub.s32 512, 512
          %263 = vsyncadd [#allocation6], %s262
          %s264 = sshll.u32 [#allocation5], 4
          %s265 = int_to_ptr.vmem [resolvable:$true] %s264
          %270 = dma.hbm_to_vmem [thread:$0]  %s1, 512, %s265, [#allocation6], 128, 128, 8
        $region16: #{tpu_custom_call.1} parent=11 // pred_fallthru
          _
        // Predicated region
        $region17: #{tpu_custom_call.1} parent=11 // pred_check
          %p271 = pneg %p91
        $region18: #{tpu_custom_call.1} parent=11 // pred_check_branch
          %273 = sbr.rel (%p271) target = $region20
        $region19: #{tpu_custom_call.1} parent=11 // pred_region
          _
        $region20: #{tpu_custom_call.1} parent=11 // pred_fallthru
          _
        // Predicated region
        $region21: #{tpu_custom_call.1} parent=11 // pred_check
          %p274 = pneg %p112
        $region22: #{tpu_custom_call.1} parent=11 // pred_check_branch
          %276 = sbr.rel (%p274) target = $region24
        $region23: #{tpu_custom_call.1} parent=11 // pred_region
          _
        $region24: #{tpu_custom_call.1} parent=11 // pred_fallthru
          _
        // Predicated region
        $region25: #{tpu_custom_call.1} parent=11 // pred_check
          %p277 = pneg %p133
        $region26: #{tpu_custom_call.1} parent=11 // pred_check_branch
          %279 = sbr.rel (%p277) target = $region28
        $region27: #{tpu_custom_call.1} parent=11 // pred_region
          _
        $region28: #{tpu_custom_call.1} parent=11 // pred_fallthru
          _
        // Predicated region
        $region29: #{tpu_custom_call.1} parent=11 // pred_check
          %p280 = pneg %p154
        $region30: #{tpu_custom_call.1} parent=11 // pred_check_branch
          %282 = sbr.rel (%p280) target = $region32
        $region31: #{tpu_custom_call.1} parent=11 // pred_region
          %s284 = ssub.s32 2048, 2048
          %285 = vsyncadd [#allocation6], %s284
          %s286 = sshll.u32 [#allocation7], 4
          %s287 = int_to_ptr.vmem [resolvable:$true] %s286
          %292 = dma.hbm_to_vmem [thread:$0]  %s5, 2048, %s287, [#allocation6], 128, 128, 8
        $region32: #{tpu_custom_call.1} parent=11 // pred_fallthru
          _
        // Predicated region
        $region33: #{tpu_custom_call.1} parent=11 // pred_check
          %p293 = pneg %p175
        $region34: #{tpu_custom_call.1} parent=11 // pred_check_branch
          %295 = sbr.rel (%p293) target = $region36
        $region35: #{tpu_custom_call.1} parent=11 // pred_region
          _
        $region36: #{tpu_custom_call.1} parent=11 // pred_fallthru
          _
        // Predicated region
        $region37: #{tpu_custom_call.1} parent=11 // pred_check
          %p296 = pneg %p196
        $region38: #{tpu_custom_call.1} parent=11 // pred_check_branch
          %298 = sbr.rel (%p296) target = $region40
        $region39: #{tpu_custom_call.1} parent=11 // pred_region
          %s300 = ssub.s32 2048, 2048
          %301 = vsyncadd [#allocation9], %s300
          %s302 = sshll.u32 [#allocation8], 4
          %s303 = int_to_ptr.vmem [resolvable:$true] %s302
          %308 = dma.hbm_to_vmem [thread:$0]  %s7, 2048, %s303, [#allocation9], 128, 128, 8
        $region40: #{tpu_custom_call.1} parent=11 // pred_fallthru
          _
        // Predicated region
        $region41: #{tpu_custom_call.1} parent=11 // pred_check
          %p309 = pneg %p217
        $region42: #{tpu_custom_call.1} parent=11 // pred_check_branch
          %311 = sbr.rel (%p309) target = $region44
        $region43: #{tpu_custom_call.1} parent=11 // pred_region
          _
        $region44: #{tpu_custom_call.1} parent=11 // pred_fallthru
          _
      $region12: #{tpu_custom_call.1} parent=5 // pred_fallthru
        _
      %p312 = scmp.lt.s32.totalorder %s23, 2
      // Predicated region
      $region45: #{tpu_custom_call.1} parent=5 // pred_check
        %p313 = pneg %p312
      $region46: #{tpu_custom_call.1} parent=5 // pred_check_branch
        %315 = sbr.rel (%p313) target = $region48
      $region47: #{tpu_custom_call.1} parent=5 // pred_region
        // Predicated region
        $region49: #{tpu_custom_call.1} parent=47 // pred_check
          %p316 = pneg %p43
        $region50: #{tpu_custom_call.1} parent=47 // pred_check_branch
          %318 = sbr.rel (%p316) target = $region52
        $region51: #{tpu_custom_call.1} parent=47 // pred_region
          %s319 = sand.u32 %s33, 1
          %s320 = scalar_lea.sflag [#allocation3], %s319
          %s321 = sand.u32 %s33, 1
          %s322 = smul.addr %s321, 8
          %s323 = scalar_lea.vmem [#allocation2], %s322
          %s325 = ssub.s32 128, 128
          %326 = vsyncadd %s320, %s325
          %s327 = smul.addr %s23, 128
          %s328 = scalar_lea.hbm %s0, %s327
          %s330 = sshll.u32 %s323, 4
          %s331 = int_to_ptr.vmem [resolvable:$true] %s330
          %333 = dma.hbm_to_vmem [thread:$0]  %s328, 128, %s331, %s320
        $region52: #{tpu_custom_call.1} parent=47 // pred_fallthru
          _
      $region48: #{tpu_custom_call.1} parent=5 // pred_fallthru
        _
      %p334 = scmp.le.s32.totalorder 1, %s23
      %p335 = scmp.lt.s32.totalorder %s23, 3
      %p336 = pnand %p334, %p335
      %p337 = pneg %p336
      // Predicated region
      $region53: #{tpu_custom_call.1} parent=5 // pred_check
        _
      $region54: #{tpu_custom_call.1} parent=5 // pred_check_branch
        %339 = sbr.rel (%p336) target = $region56
      $region55: #{tpu_custom_call.1} parent=5 // pred_region
        %s340 = ssub.s32 %s23, 1
        %s341 = sand.u32 %s36, 1
        %s342 = scalar_lea.sflag [#allocation3], %s341
        %s343 = sand.u32 %s36, 1
        %s344 = smul.addr %s343, 8
        %s345 = scalar_lea.vmem [#allocation2], %s344
        // Predicated region
        $region57: #{tpu_custom_call.1} parent=55 // pred_check
          %p346 = pneg %p49
        $region58: #{tpu_custom_call.1} parent=55 // pred_check_branch
          %348 = sbr.rel (%p346) target = $region60
        $region59: #{tpu_custom_call.1} parent=55 // pred_region
          %349 = dma.done %s342, 128
        $region60: #{tpu_custom_call.1} parent=55 // pred_fallthru
          _
        // Predicated region
        $region61: #{tpu_custom_call.1} parent=55 // pred_check
          %p350 = pneg %p70
        $region62: #{tpu_custom_call.1} parent=55 // pred_check_branch
          %352 = sbr.rel (%p350) target = $region64
        $region63: #{tpu_custom_call.1} parent=55 // pred_region
          %353 = dma.done [#allocation6], 512
        $region64: #{tpu_custom_call.1} parent=55 // pred_fallthru
          _
        // Predicated region
        $region65: #{tpu_custom_call.1} parent=55 // pred_check
          %p354 = pneg %p154
        $region66: #{tpu_custom_call.1} parent=55 // pred_check_branch
          %356 = sbr.rel (%p354) target = $region68
        $region67: #{tpu_custom_call.1} parent=55 // pred_region
          %357 = dma.done [#allocation6], 2048
        $region68: #{tpu_custom_call.1} parent=55 // pred_fallthru
          _
        // Predicated region
        $region69: #{tpu_custom_call.1} parent=55 // pred_check
          %p358 = pneg %p196
        $region70: #{tpu_custom_call.1} parent=55 // pred_check_branch
          %360 = sbr.rel (%p358) target = $region72
        $region71: #{tpu_custom_call.1} parent=55 // pred_region
          %361 = dma.done [#allocation9], 2048
        $region72: #{tpu_custom_call.1} parent=55 // pred_fallthru
          _
        %s362 = sand.u32 %s36, 1
        %s363 = scalar_lea.sflag [#allocation3], %s362
        %s364 = sand.u32 %s36, 1
        %s365 = smul.addr %s364, 8
        %s366 = scalar_lea.vmem [#allocation2], %s365
        %p367 = pneg %p49
        %p368 = pneg %p46
        %p369 = pneg %p70
        %p370 = pneg %p67
        %p371 = pneg %p91
        %p372 = pneg %p88
        %p373 = pneg %p112
        %p374 = pneg %p109
        %p375 = pneg %p133
        %p376 = pneg %p130
        %p377 = pneg %p154
        %p378 = pneg %p151
        %p379 = pneg %p175
        %p380 = pneg %p172
        %p381 = pneg %p196
        %p382 = pneg %p193
        %p383 = pneg %p217
        %p384 = pneg %p214
        %p385 = pneg %p243
        %p386 = pneg %p240
        %s387 = sand.u32 %s230, 1
        %s388 = scalar_lea.sflag [#allocation4], %s387
        %s389 = sand.u32 %s230, 1
        %s390 = smul.addr %s389, 8
        %s391 = scalar_lea.vmem [#allocation10], %s390
        %v392 = vld [vmem:[%s345] sm:$0xff]
        %v393 = vld [vmem:[#allocation5] sm:$0xff]
        %v394 = vld [vmem:[#allocation5 + $0x8] sm:$0xff]
        %v395 = vld [vmem:[#allocation5 + $0x10] sm:$0xff]
        %v396 = vld [vmem:[#allocation5 + $0x18] sm:$0xff]
        %v397 = vld [vmem:[%s2] sm:$0x1]
        %v399 = vlaneseq
        %v400 = vshrl.u32 %v399, 7
        %v401 = vsub.s32 0, %v400
        %v402 = vrot.slane %v397, %v401
        %vm404 = vcmask 261120
        %v406 = vsel %vm404, %v392, 0
        %408 = vmatprep.subr.mxu0 0.0
        %409 = vmatpush1.msra.mxu0 %v393
        %410 = vmatprep.subr.mxu0 0.0
        %411 = vmatpush1.msra.mxu0 %v394
        %412 = vmatprep.subr.mxu0 0.0
        %413 = vmatpush1.msra.mxu0 %v395
        %414 = vmatprep.subr.mxu0 0.0
        %415 = vmatpush1.msra.mxu0 %v396
        %416 = vmatprep.subr.mxu0 0.0
        %417 = vmatpush1.msra.mxu0 0.0
        %418 = vmatprep.subr.mxu0 0.0
        %419 = vmatpush1.msra.mxu0 0.0
        %420 = vmatprep.subr.mxu0 0.0
        %421 = vmatpush1.msra.mxu0 0.0
        %422 = vmatprep.subr.mxu0 0.0
        %423 = vmatpush1.msra.mxu0 0.0
        %424 = vmatprep.subr.mxu0 0.0
        %425 = vmatpush1.msra.mxu0 0.0
        %426 = vmatprep.subr.mxu0 0.0
        %427 = vmatpush1.msra.mxu0 0.0
        %428 = vmatprep.subr.mxu0 0.0
        %429 = vmatpush1.msra.mxu0 0.0
        %430 = vmatprep.subr.mxu0 0.0
        %431 = vmatpush1.msra.mxu0 0.0
        %432 = vmatprep.subr.mxu0 0.0
        %433 = vmatpush1.msra.mxu0 0.0
        %434 = vmatprep.subr.mxu0 0.0
        %435 = vmatpush1.msra.mxu0 0.0
        %436 = vmatprep.subr.mxu0 0.0
        %437 = vmatpush1.msra.mxu0 0.0
        %438 = vmatprep.subr.mxu0 0.0
        %439 = vmatpush1.msra.mxu0 0.0
        %440 = vmatprep.subr.mxu0 0.0
        %441 = vmatpush1.msra.mxu0 0.0
        %442 = vmatprep.subr.mxu0 0.0
        %443 = vmatpush1.msra.mxu0 0.0
        %444 = vmatprep.subr.mxu0 0.0
        %445 = vmatpush1.msra.mxu0 0.0
        %446 = vmatprep.subr.mxu0 0.0
        %447 = vmatpush1.msra.mxu0 0.0
        %448 = vmatprep.subr.mxu0 0.0
        %449 = vmatpush1.msra.mxu0 0.0
        %450 = vmatprep.subr.mxu0 0.0
        %451 = vmatpush1.msra.mxu0 0.0
        %452 = vmatprep.subr.mxu0 0.0
        %453 = vmatpush1.msra.mxu0 0.0
        %454 = vmatprep.subr.mxu0 0.0
        %455 = vmatpush1.msra.mxu0 0.0
        %456 = vmatprep.subr.mxu0 0.0
        %457 = vmatpush1.msra.mxu0 0.0
        %458 = vmatprep.subr.mxu0 0.0
        %459 = vmatpush1.msra.mxu0 0.0
        %460 = vmatprep.subr.mxu0 0.0
        %461 = vmatpush1.msra.mxu0 0.0
        %462 = vmatprep.subr.mxu0 0.0
        %463 = vmatpush1.msra.mxu0 0.0
        %464 = vmatprep.subr.mxu0 0.0
        %465 = vmatpush1.msra.mxu0 0.0
        %466 = vmatprep.subr.mxu0 0.0
        %467 = vmatpush1.msra.mxu0 0.0
        %468 = vmatprep.subr.mxu0 0.0
        %469 = vmatpush1.msra.mxu0 0.0
        %470 = vmatprep.subr.mxu0 0.0
        %471 = vmatpush1.msra.mxu0 0.0
        %472 = vmatprep.mubr.f32.mxu0 0.0
        %473 = vmatmul.mubr.f32.gmra.mrb[0].mxu0 %v406
        %v474 = vpop.f32.mrb[0].mxu0
        %v475 = vadd.f32 %v402, %v474
        %v476 = vpop.f32.mrb[0].mxu0
        %477 = vdwg.mxu0
        %478 = vadd.xlane.f32.xlu0 %v475
        %v479 = vpop.xlane.xlu0 %478
        %v480 = vmul.f32 %v479, 0.03125
        %v481 = vlaneseq
        %v482 = vand.u32 %v481, 127
        %vm483 = vcmp.lt.s32.totalorder %v482, 32
        %v484 = vsub.f32 %v475, %v480
        %v485 = vsel %vm483, %v484, 0.0
        %v486 = vmul.f32 %v485, %v485
        %487 = vadd.xlane.f32.xlu0 %v486
        %v488 = vpop.xlane.xlu0 %487
        %v489 = vmul.f32 %v488, 0.03125
        %v490 = vadd.f32 %v489, 1e-05
        %v491 = vrsqrt.pop %v490
        %v492 = vmul.f32 %v485, %v491
        %v493 = vld [vmem:[%s3] sm:$0x1]
        %v495 = vlaneseq
        %v496 = vshrl.u32 %v495, 7
        %v497 = vsub.s32 0, %v496
        %v498 = vrot.slane %v493, %v497
        %v500 = vmul.f32 %v492, %v498
        %v501 = vld [vmem:[%s4] sm:$0x1]
        %v503 = vlaneseq
        %v504 = vshrl.u32 %v503, 7
        %v505 = vsub.s32 0, %v504
        %v506 = vrot.slane %v501, %v505
        %v508 = vadd.f32 %v500, %v506
        %v509 = vld [vmem:[#allocation7] sm:$0xff]
        %v510 = vld [vmem:[#allocation7 + $0x8] sm:$0xff]
        %v511 = vld [vmem:[#allocation7 + $0x10] sm:$0xff]
        %v512 = vld [vmem:[#allocation7 + $0x18] sm:$0xff]
        %v513 = vld [vmem:[#allocation7 + $0x20] sm:$0xff]
        %v514 = vld [vmem:[#allocation7 + $0x28] sm:$0xff]
        %v515 = vld [vmem:[#allocation7 + $0x30] sm:$0xff]
        %v516 = vld [vmem:[#allocation7 + $0x38] sm:$0xff]
        %v517 = vld [vmem:[#allocation7 + $0x40] sm:$0xff]
        %v518 = vld [vmem:[#allocation7 + $0x48] sm:$0xff]
        %v519 = vld [vmem:[#allocation7 + $0x50] sm:$0xff]
        %v520 = vld [vmem:[#allocation7 + $0x58] sm:$0xff]
        %v521 = vld [vmem:[#allocation7 + $0x60] sm:$0xff]
        %v522 = vld [vmem:[#allocation7 + $0x68] sm:$0xff]
        %v523 = vld [vmem:[#allocation7 + $0x70] sm:$0xff]
        %v524 = vld [vmem:[#allocation7 + $0x78] sm:$0xff]
        %v525 = vld [vmem:[%s6] sm:$0x1]
        %v527 = vlaneseq
        %v528 = vshrl.u32 %v527, 7
        %v529 = vsub.s32 0, %v528
        %v530 = vrot.slane %v525, %v529
        %532 = vmatprep.subr.mxu0 0.0
        %533 = vmatpush1.msra.mxu0 %v509
        %534 = vmatprep.subr.mxu0 0.0
        %535 = vmatpush1.msra.mxu0 %v510
        %536 = vmatprep.subr.mxu0 0.0
        %537 = vmatpush1.msra.mxu0 %v511
        %538 = vmatprep.subr.mxu0 0.0
        %539 = vmatpush1.msra.mxu0 %v512
        %540 = vmatprep.subr.mxu0 0.0
        %541 = vmatpush1.msra.mxu0 %v513
        %542 = vmatprep.subr.mxu0 0.0
        %543 = vmatpush1.msra.mxu0 %v514
        %544 = vmatprep.subr.mxu0 0.0
        %545 = vmatpush1.msra.mxu0 %v515
        %546 = vmatprep.subr.mxu0 0.0
        %547 = vmatpush1.msra.mxu0 %v516
        %548 = vmatprep.subr.mxu0 0.0
        %549 = vmatpush1.msra.mxu0 %v517
        %550 = vmatprep.subr.mxu0 0.0
        %551 = vmatpush1.msra.mxu0 %v518
        %552 = vmatprep.subr.mxu0 0.0
        %553 = vmatpush1.msra.mxu0 %v519
        %554 = vmatprep.subr.mxu0 0.0
        %555 = vmatpush1.msra.mxu0 %v520
        %556 = vmatprep.subr.mxu0 0.0
        %557 = vmatpush1.msra.mxu0 %v521
        %558 = vmatprep.subr.mxu0 0.0
        %559 = vmatpush1.msra.mxu0 %v522
        %560 = vmatprep.subr.mxu0 0.0
        %561 = vmatpush1.msra.mxu0 %v523
        %562 = vmatprep.subr.mxu0 0.0
        %563 = vmatpush1.msra.mxu0 %v524
        %564 = vmatprep.subr.mxu0 0.0
        %565 = vmatpush1.msra.mxu0 0.0
        %566 = vmatprep.subr.mxu0 0.0
        %567 = vmatpush1.msra.mxu0 0.0
        %568 = vmatprep.subr.mxu0 0.0
        %569 = vmatpush1.msra.mxu0 0.0
        %570 = vmatprep.subr.mxu0 0.0
        %571 = vmatpush1.msra.mxu0 0.0
        %572 = vmatprep.subr.mxu0 0.0
        %573 = vmatpush1.msra.mxu0 0.0
        %574 = vmatprep.subr.mxu0 0.0
        %575 = vmatpush1.msra.mxu0 0.0
        %576 = vmatprep.subr.mxu0 0.0
        %577 = vmatpush1.msra.mxu0 0.0
        %578 = vmatprep.subr.mxu0 0.0
        %579 = vmatpush1.msra.mxu0 0.0
        %580 = vmatprep.subr.mxu0 0.0
        %581 = vmatpush1.msra.mxu0 0.0
        %582 = vmatprep.subr.mxu0 0.0
        %583 = vmatpush1.msra.mxu0 0.0
        %584 = vmatprep.subr.mxu0 0.0
        %585 = vmatpush1.msra.mxu0 0.0
        %586 = vmatprep.subr.mxu0 0.0
        %587 = vmatpush1.msra.mxu0 0.0
        %588 = vmatprep.subr.mxu0 0.0
        %589 = vmatpush1.msra.mxu0 0.0
        %590 = vmatprep.subr.mxu0 0.0
        %591 = vmatpush1.msra.mxu0 0.0
        %592 = vmatprep.subr.mxu0 0.0
        %593 = vmatpush1.msra.mxu0 0.0
        %594 = vmatprep.subr.mxu0 0.0
        %595 = vmatpush1.msra.mxu0 0.0
        %596 = vmatprep.mubr.f32.mxu0 0.0
        %597 = vmatmul.mubr.f32.gmra.mrb[0].mxu0 %v508
        %v598 = vpop.f32.mrb[0].mxu0
        %v599 = vadd.f32 %v530, %v598
        %v600 = vpop.f32.mrb[0].mxu0
        %601 = vdwg.mxu0
        %v602 = vmul.f32 %v599, 0.5
        %v603 = vmul.f32 %v599, 0.70710677
        %vm604 = vcmp.lt.f32.partialorder %v603, 0.0
        %v605 = vsel %vm604, -1.0, 1.0
        %v606 = vand.u32 2147483647, %v603
        %v607 = vmul.f32 %v606, 0.3275911
        %v608 = vadd.f32 %v607, 1.0
        %v609 = vrcp.pop %v608
        %v610 = vmul.f32 1.0, %v609
        %v611 = vmul.f32 %v610, 1.0614054
        %v612 = vadd.f32 %v611, -1.4531521
        %v613 = vmul.f32 %v612, %v610
        %v614 = vadd.f32 %v613, 1.4214138
        %v615 = vmul.f32 %v614, %v610
        %v616 = vadd.f32 %v615, -0.28449672
        %v617 = vmul.f32 %v616, %v610
        %v618 = vadd.f32 %v617, 0.2548296
        %v619 = vmul.f32 %v618, %v610
        %v620 = vsub.f32 0.0, %v606
        %v621 = vmul.f32 %v620, %v606
        %v622 = vmul.f32 %v621, 1.442695
        %v623 = vpow.pop %v622
        %v624 = vmul.f32 %v619, %v623
        %v625 = vsub.f32 1.0, %v624
        %v626 = vmul.f32 %v605, %v625
        %v627 = vadd.f32 %v626, 1.0
        %v628 = vmul.f32 %v602, %v627
        %v629 = vld [vmem:[#allocation8] sm:$0xff]
        %v630 = vld [vmem:[#allocation8 + $0x8] sm:$0xff]
        %v631 = vld [vmem:[#allocation8 + $0x10] sm:$0xff]
        %v632 = vld [vmem:[#allocation8 + $0x18] sm:$0xff]
        %v633 = vld [vmem:[#allocation8 + $0x20] sm:$0xff]
        %v634 = vld [vmem:[#allocation8 + $0x28] sm:$0xff]
        %v635 = vld [vmem:[#allocation8 + $0x30] sm:$0xff]
        %v636 = vld [vmem:[#allocation8 + $0x38] sm:$0xff]
        %v637 = vld [vmem:[#allocation8 + $0x40] sm:$0xff]
        %v638 = vld [vmem:[#allocation8 + $0x48] sm:$0xff]
        %v639 = vld [vmem:[#allocation8 + $0x50] sm:$0xff]
        %v640 = vld [vmem:[#allocation8 + $0x58] sm:$0xff]
        %v641 = vld [vmem:[#allocation8 + $0x60] sm:$0xff]
        %v642 = vld [vmem:[#allocation8 + $0x68] sm:$0xff]
        %v643 = vld [vmem:[#allocation8 + $0x70] sm:$0xff]
        %v644 = vld [vmem:[#allocation8 + $0x78] sm:$0xff]
        %v645 = vld [vmem:[%s8] sm:$0x1]
        %v647 = vlaneseq
        %v648 = vshrl.u32 %v647, 7
        %v649 = vsub.s32 0, %v648
        %v650 = vrot.slane %v645, %v649
        %652 = vmatprep.subr.mxu0 0.0
        %653 = vmatpush1.msra.mxu0 %v629
        %654 = vmatprep.subr.mxu0 0.0
        %655 = vmatpush1.msra.mxu0 %v630
        %656 = vmatprep.subr.mxu0 0.0
        %657 = vmatpush1.msra.mxu0 %v631
        %658 = vmatprep.subr.mxu0 0.0
        %659 = vmatpush1.msra.mxu0 %v632
        %660 = vmatprep.subr.mxu0 0.0
        %661 = vmatpush1.msra.mxu0 %v633
        %662 = vmatprep.subr.mxu0 0.0
        %663 = vmatpush1.msra.mxu0 %v634
        %664 = vmatprep.subr.mxu0 0.0
        %665 = vmatpush1.msra.mxu0 %v635
        %666 = vmatprep.subr.mxu0 0.0
        %667 = vmatpush1.msra.mxu0 %v636
        %668 = vmatprep.subr.mxu0 0.0
        %669 = vmatpush1.msra.mxu0 %v637
        %670 = vmatprep.subr.mxu0 0.0
        %671 = vmatpush1.msra.mxu0 %v638
        %672 = vmatprep.subr.mxu0 0.0
        %673 = vmatpush1.msra.mxu0 %v639
        %674 = vmatprep.subr.mxu0 0.0
        %675 = vmatpush1.msra.mxu0 %v640
        %676 = vmatprep.subr.mxu0 0.0
        %677 = vmatpush1.msra.mxu0 %v641
        %678 = vmatprep.subr.mxu0 0.0
        %679 = vmatpush1.msra.mxu0 %v642
        %680 = vmatprep.subr.mxu0 0.0
        %681 = vmatpush1.msra.mxu0 %v643
        %682 = vmatprep.subr.mxu0 0.0
        %683 = vmatpush1.msra.mxu0 %v644
        %684 = vmatprep.subr.mxu0 0.0
        %685 = vmatpush1.msra.mxu0 0.0
        %686 = vmatprep.subr.mxu0 0.0
        %687 = vmatpush1.msra.mxu0 0.0
        %688 = vmatprep.subr.mxu0 0.0
        %689 = vmatpush1.msra.mxu0 0.0
        %690 = vmatprep.subr.mxu0 0.0
        %691 = vmatpush1.msra.mxu0 0.0
        %692 = vmatprep.subr.mxu0 0.0
        %693 = vmatpush1.msra.mxu0 0.0
        %694 = vmatprep.subr.mxu0 0.0
        %695 = vmatpush1.msra.mxu0 0.0
        %696 = vmatprep.subr.mxu0 0.0
        %697 = vmatpush1.msra.mxu0 0.0
        %698 = vmatprep.subr.mxu0 0.0
        %699 = vmatpush1.msra.mxu0 0.0
        %700 = vmatprep.subr.mxu0 0.0
        %701 = vmatpush1.msra.mxu0 0.0
        %702 = vmatprep.subr.mxu0 0.0
        %703 = vmatpush1.msra.mxu0 0.0
        %704 = vmatprep.subr.mxu0 0.0
        %705 = vmatpush1.msra.mxu0 0.0
        %706 = vmatprep.subr.mxu0 0.0
        %707 = vmatpush1.msra.mxu0 0.0
        %708 = vmatprep.subr.mxu0 0.0
        %709 = vmatpush1.msra.mxu0 0.0
        %710 = vmatprep.subr.mxu0 0.0
        %711 = vmatpush1.msra.mxu0 0.0
        %712 = vmatprep.subr.mxu0 0.0
        %713 = vmatpush1.msra.mxu0 0.0
        %714 = vmatprep.subr.mxu0 0.0
        %715 = vmatpush1.msra.mxu0 0.0
        %716 = vmatprep.mubr.f32.mxu0 0.0
        %717 = vmatmul.mubr.f32.gmra.mrb[0].mxu0 %v628
        %v718 = vpop.f32.mrb[0].mxu0
        %v719 = vadd.f32 %v650, %v718
        %v720 = vpop.f32.mrb[0].mxu0
        %721 = vdwg.mxu0
        %722 = vst [vmem:[%s391] sm:$0xff] %v719
        %s723 = sand.u32 %s230, 1
        %s724 = scalar_lea.sflag [#allocation4], %s723
        %s725 = sand.u32 %s230, 1
        %s726 = smul.addr %s725, 8
        %s727 = scalar_lea.vmem [#allocation10], %s726
        // Predicated region
        $region73: #{tpu_custom_call.1} parent=55 // pred_check
          %p728 = pneg %p240
        $region74: #{tpu_custom_call.1} parent=55 // pred_check_branch
          %730 = sbr.rel (%p728) target = $region76
        $region75: #{tpu_custom_call.1} parent=55 // pred_region
          %s732 = ssub.s32 128, 128
          %733 = vsyncadd %s724, %s732
          %s734 = smul.addr %s28, 128
          %s735 = scalar_lea.hbm %s9, %s734
          %s737 = sshll.u32 %s727, 4
          %s738 = int_to_ptr.vmem [resolvable:$true] %s737
          %740 = dma.vmem_to_hbm [thread:$0]  %s738, 128, %s735, %s724
        $region76: #{tpu_custom_call.1} parent=55 // pred_fallthru
          _
      $region56: #{tpu_custom_call.1} parent=5 // pred_fallthru
        _
      %p741 = scmp.le.s32.totalorder 2, %s23
      // Predicated region
      $region77: #{tpu_custom_call.1} parent=5 // pred_check
        %p742 = pneg %p741
      $region78: #{tpu_custom_call.1} parent=5 // pred_check_branch
        %744 = sbr.rel (%p742) target = $region80
      $region79: #{tpu_custom_call.1} parent=5 // pred_region
        %s745 = ssub.s32 %s23, 2
        // Predicated region
        $region81: #{tpu_custom_call.1} parent=79 // pred_check
          %p746 = pneg %p246
        $region82: #{tpu_custom_call.1} parent=79 // pred_check_branch
          %748 = sbr.rel (%p746) target = $region84
        $region83: #{tpu_custom_call.1} parent=79 // pred_region
          %s749 = sand.u32 %s231, 1
          %s750 = scalar_lea.sflag [#allocation4], %s749
          %s751 = sand.u32 %s231, 1
          %s752 = smul.addr %s751, 8
          %s753 = scalar_lea.vmem [#allocation10], %s752
          %754 = dma.done %s750, 128
        $region84: #{tpu_custom_call.1} parent=79 // pred_fallthru
          _
      $region80: #{tpu_custom_call.1} parent=5 // pred_fallthru
        _
    $region6: #{tpu_custom_call.1} parent=1 // loop_footer
      %s27 = sadd.s32 1, %s23
    $region7: #{tpu_custom_call.1} parent=1 // loop_footer_branch
      %22 = sbr.rel target = $region3
    $region8: #{tpu_custom_call.1} parent=1 // loop_exit
      _
    %755 = vsyncpa [#allocation3], 1
    %s756 = scalar_lea.sflag [#allocation3], 1
    %757 = vsyncpa %s756, 1
    %758 = vsyncpa [#allocation6], 1
    %759 = vsyncpa [#allocation9], 1
    %760 = vsyncpa [#allocation4], 1
    %s761 = scalar_lea.sflag [#allocation4], 1
    %762 = vsyncpa %s761, 1

</llo_original>
